<compile_context>
chip_gen: v6e
topology: v6e:2x2x1
jax: 0.10.0
libtpu: 0.0.40
codegen_flags: <defaults>
</compile_context>

<pallas_src>
import functools

import jax
import jax.numpy as jnp
from jax.experimental import pallas as pl
from jax.experimental.pallas import tpu as pltpu


# ----------------------------------------------------------------------------
# Fused Pallas kernel
# ----------------------------------------------------------------------------
def _market_encoder_kernel(x_ref, wih_f_ref, whh_f_ref, b_f_ref,
                           gsc_ref, gof_ref, wih_b_ref, b_b_ref,
                           rbw_ref, rbb_ref, rbg_ref, rbbeta_ref,
                           out_ref, xg_ref, *, T, Bp, H, OUTP):
    f32 = jnp.float32

    # ---- prologue: one MXU pass for the whole input projection --------------
    # x_ref is time-major (T*Bp, M); i/f/o columns of wih_f/b_f are pre-scaled
    # by 0.5 so a single tanh recovers all gate activations below.
    xg_ref[...] = (jnp.dot(x_ref[...], wih_f_ref[...],
                           preferred_element_type=f32) + b_f_ref[...])

    whh = whh_f_ref[...]                               # (H, 4H), i/f/o cols *0.5
    # Hoist broadcasts out of the recurrence (JAX does not CSE broadcast_in_dim).
    gsc = jnp.broadcast_to(gsc_ref[...], (Bp, 4 * H))  # 0.5 on i/f/o, 1.0 on g
    gof = jnp.broadcast_to(gof_ref[...], (Bp, 4 * H))  # 0.5 on i/f/o, 0.0 on g

    def lstm_step(row, h, c):
        # One fused recurrent matmul + one EUP tanh pass per step.
        g = xg_ref[pl.ds(row, Bp), :] + jnp.dot(h.astype(whh.dtype), whh,
                                                preferred_element_type=f32)
        t = jnp.tanh(g)
        act = t * gsc + gof          # sigmoid(x)=0.5*tanh(x/2)+0.5 (i,f,o); tanh (g)
        i_g = act[:, 0 * H:1 * H]
        f_g = act[:, 1 * H:2 * H]
        g_g = act[:, 2 * H:3 * H]
        o_g = act[:, 3 * H:4 * H]
        c = f_g * c + i_g * g_g
        h = o_g * jnp.tanh(c)
        return h, c

    h = jnp.zeros((Bp, H), f32)
    c = jnp.zeros((Bp, H), f32)
    if T <= 8:
        # Small T: full unroll (static slices, no loop overhead).
        for t in range(T):
            h, c = lstm_step(t * Bp, h, c)
    else:
        # Production T: bounded vreg live ranges via fori_loop + ref indexing.
        def fori_body(t, carry):
            row = pl.multiple_of(t * Bp, 8)
            return lstm_step(row, *carry)
        h, c = jax.lax.fori_loop(0, T, fori_body, (h, c), unroll=4)
    h_fwd = h                                          # forward hidden at t = T-1

    # ---- reverse LSTM: its output at the last position is its FIRST step ----
    # (zero initial state) on x[:, -1, :]; h@Whh and f*c vanish exactly, and the
    # forget-gate columns were dropped from wih_b/b_b at prep time (M, 3H).
    x_last = x_ref[pl.ds((T - 1) * Bp, Bp), :]
    gb = jnp.dot(x_last, wih_b_ref[...], preferred_element_type=f32) + b_b_ref[...]
    i_b = jax.nn.sigmoid(gb[:, 0 * H:1 * H])
    g_b = jnp.tanh(gb[:, 1 * H:2 * H])
    o_b = jax.nn.sigmoid(gb[:, 2 * H:3 * H])
    h_bwd = o_b * jnp.tanh(i_b * g_b)

    # ---- residual blocks on the (Bp, 2H) last-timestep rows only ------------
    out = jnp.concatenate([h_fwd, h_bwd], axis=-1)     # (Bp, 2H)
    for k in range(2):
        y = jnp.dot(out.astype(rbw_ref.dtype), rbw_ref[k],
                    preferred_element_type=f32) + rbb_ref[k]
        mu = jnp.mean(y, axis=-1, keepdims=True)
        var = jnp.mean(jnp.square(y - mu), axis=-1, keepdims=True)
        ln = (y - mu) * jax.lax.rsqrt(var + 1e-5) * rbg_ref[k] + rbbeta_ref[k]
        out = out + jnp.maximum(ln, 0.0)

    # ---- lane-dense output store (2H padded up to a multiple of 128) --------
    if OUTP > 2 * H:
        out = jnp.concatenate([out, jnp.zeros((Bp, OUTP - 2 * H), f32)], axis=-1)
    out_ref[...] = out


# ----------------------------------------------------------------------------
# One-time parameter preparation (all re-layouts hoisted out of the call path)
# ----------------------------------------------------------------------------
def prepare_params(params, matmul_dtype=jnp.float32):
    """Pre-pack weights once. matmul_dtype=jnp.bfloat16 for production H;
    f32 here (tiny H/M -> no MXU benefit and exact reference check)."""
    H = params["hidden_dim"]
    dt = matmul_dtype
    ones_h = jnp.ones((1, H), jnp.float32)
    # sigmoid(x) = 0.5*tanh(x/2) + 0.5 -> fold the 0.5 into i/f/o columns.
    gate_scale = jnp.concatenate([0.5 * ones_h, 0.5 * ones_h, ones_h, 0.5 * ones_h], -1)
    gate_off = jnp.concatenate([0.5 * ones_h, 0.5 * ones_h, 0.0 * ones_h, 0.5 * ones_h], -1)

    wih_b, b_b = params["wih_b"], params["b_b"]
    prepared = dict(
        hidden_dim=H,
        matmul_dtype=dt,
        wih_f=(params["wih_f"] * gate_scale).astype(dt),
        whh_f=(params["whh_f"] * gate_scale).astype(dt),
        b_f=(params["b_f"] * gate_scale).astype(jnp.float32),
        gate_scale=gate_scale,
        gate_off=gate_off,
        # reverse LSTM: keep only i, g, o columns (forget gate is dead).
        wih_b3=jnp.concatenate([wih_b[:, 0:H], wih_b[:, 2 * H:3 * H],
                                wih_b[:, 3 * H:4 * H]], -1).astype(dt),
        b_b3=jnp.concatenate([b_b[:, 0:H], b_b[:, 2 * H:3 * H],
                              b_b[:, 3 * H:4 * H]], -1).astype(jnp.float32),
        rbw=jnp.stack([blk["w"] for blk in params["res_blocks"]], 0).astype(dt),
        rbb=jnp.stack([blk["b"] for blk in params["res_blocks"]], 0),
        rbg=jnp.stack([blk["gamma"] for blk in params["res_blocks"]], 0),
        rbbeta=jnp.stack([blk["beta"] for blk in params["res_blocks"]], 0),
    )
    return prepared


# ----------------------------------------------------------------------------
# Per-call wrapper (single pallas_call; only x layout work remains per call)
# ----------------------------------------------------------------------------
def market_encoder_forward(prepared, x):
    """x: (B, T, input_dim) batch-first, as in the PyTorch module."""
    B, T, M = x.shape
    H = prepared["hidden_dim"]
    dt = prepared["matmul_dtype"]
    Bp = ((B + 7) // 8) * 8                       # pad batch to 8 sublanes
    OUTP = ((2 * H + 127) // 128) * 128           # lane-dense output width

    xp = x if Bp == B else jnp.pad(x, ((0, Bp - B), (0, 0), (0, 0)))
    x_flat = jnp.transpose(xp, (1, 0, 2)).reshape(T * Bp, M).astype(dt)

    operands = (x_flat, prepared["wih_f"], prepared["whh_f"], prepared["b_f"],
                prepared["gate_scale"], prepared["gate_off"],
                prepared["wih_b3"], prepared["b_b3"],
                prepared["rbw"], prepared["rbb"], prepared["rbg"],
                prepared["rbbeta"])

    flops = int(2 * T * Bp * M * 4 * H            # prologue input projection
                + 2 * T * Bp * H * 4 * H          # recurrence
                + 2 * Bp * M * 3 * H              # reverse single step
                + 2 * 2 * Bp * (2 * H) * (2 * H))  # residual blocks
    transcendentals = int(T * Bp * 5 * H + 4 * Bp * H + 4 * Bp)
    bytes_accessed = int(sum(a.size * a.dtype.itemsize for a in operands)
                         + Bp * OUTP * 4)

    kernel = functools.partial(_market_encoder_kernel,
                               T=T, Bp=Bp, H=H, OUTP=OUTP)
    vmem = pl.BlockSpec(memory_space=pltpu.MemorySpace.VMEM)
    # NOTE: for Bp >= 16 on v7x, add a batch grid (grid=(Bp//Bt,)) with
    # dimension_semantics=("parallel",) so both TensorCores get a slice.
    out_pad = pl.pallas_call(
        kernel,
        out_shape=jax.ShapeDtypeStruct((Bp, OUTP), jnp.float32),
        in_specs=[vmem] * len(operands),
        out_specs=vmem,
        scratch_shapes=[pltpu.VMEM((T * Bp, 4 * H), jnp.float32)],
        compiler_params=pltpu.CompilerParams(vmem_limit_bytes=32 * 1024 * 1024),
        cost_estimate=pl.CostEstimate(flops=flops,
                                      transcendentals=transcendentals,
                                      bytes_accessed=bytes_accessed),
    )(*operands)
    return out_pad[:B, :2 * H]


# ----------------------------------------------------------------------------
# Pure-JAX reference (full, non-pruned computation) for correctness check
# ----------------------------------------------------------------------------
def reference_forward(params, x):
    H = params["hidden_dim"]
    B, T, M = x.shape
    xt = jnp.transpose(x, (1, 0, 2))                        # (T, B, M)

    def lstm_scan(seq, wih, whh, b):
        def step(carry, xt_):
            h, c = carry
            g = xt_ @ wih + h @ whh + b[0]
            i = jax.nn.sigmoid(g[:, :H])
            f = jax.nn.sigmoid(g[:, H:2 * H])
            gg = jnp.tanh(g[:, 2 * H:3 * H])
            o = jax.nn.sigmoid(g[:, 3 * H:])
            c = f * c + i * gg
            h = o * jnp.tanh(c)
            return (h, c), h
        init = (jnp.zeros((B, H), jnp.float32), jnp.zeros((B, H), jnp.float32))
        _, hs = jax.lax.scan(step, init, seq)
        return hs                                           # (T, B, H)

    hf = lstm_scan(xt, params["wih_f"], params["whh_f"], params["b_f"])
    hb = lstm_scan(xt[::-1], params["wih_b"], params["whh_b"], params["b_b"])[::-1]
    out = jnp.concatenate([hf, hb], axis=-1)                # (T, B, 2H)
    for blk in params["res_blocks"]:
        y = out @ blk["w"] + blk["b"]
        mu = y.mean(-1, keepdims=True)
        var = ((y - mu) ** 2).mean(-1, keepdims=True)
        ln = (y - mu) * jax.lax.rsqrt(var + 1e-5) * blk["gamma"] + blk["beta"]
        out = out + jnp.maximum(ln, 0.0)
    return out[-1]                                          # == out[:, -1, :] batch-first


# ----------------------------------------------------------------------------
# Deterministic synthetic parameters (module shapes only)
# ----------------------------------------------------------------------------
def init_params(key, input_dim, hidden_dim):
    H, M = hidden_dim, input_dim
    keys = iter(jax.random.split(key, 16))

    def w(shape, scale=0.1):
        return (scale * jax.random.normal(next(keys), shape)).astype(jnp.float32)

    p = dict(hidden_dim=H)
    # Bidirectional LSTM; weights stored transposed vs PyTorch (x @ W form),
    # bias = b_ih + b_hh combined. Gate order i, f, g, o (PyTorch).
    p["wih_f"], p["whh_f"], p["b_f"] = w((M, 4 * H)), w((H, 4 * H)), w((1, 4 * H), 0.01)
    p["wih_b"], p["whh_b"], p["b_b"] = w((M, 4 * H)), w((H, 4 * H)), w((1, 4 * H), 0.01)
    # Two residual blocks: Linear(2H, 2H) + LayerNorm(2H) + ReLU
    p["res_blocks"] = [dict(w=w((2 * H, 2 * H), 0.05), b=w((1, 2 * H), 0.01),
                            gamma=jnp.ones((1, 2 * H), jnp.float32),
                            beta=jnp.zeros((1, 2 * H), jnp.float32)) for _ in range(2)]
    return p


if __name__ == "__main__":
    B, T, M, H = 4, 8, 8, 32          # batch, seq, input_dim, hidden_dim
    key = jax.random.PRNGKey(0)
    pkey, xkey = jax.random.split(key)
    params = init_params(pkey, input_dim=M, hidden_dim=H)
    x = jax.random.normal(xkey, (B, T, M), jnp.float32)

    # One-time weight packing (f32 matmuls for the exact check; use
    # matmul_dtype=jnp.bfloat16 for production-sized H on v5e/v6e/v7x).
    prepared = prepare_params(params, matmul_dtype=jnp.float32)
    fwd = jax.jit(functools.partial(market_encoder_forward, prepared))

    out = jax.block_until_ready(fwd(x))
    ref = jax.block_until_ready(reference_forward(params, x))

    assert out.shape == (B, 2 * H), out.shape
    assert jnp.allclose(out, ref, rtol=5e-3, atol=5e-3), float(jnp.max(jnp.abs(out - ref)))
    print("KERNEL_OK")
</pallas_src>

<mosaic_0001>
module attributes {stable_mosaic.version = 11 : i64} {
  func.func @_market_encoder_kernel(%arg0: memref<64x8xf32, #tpu.memory_space<vmem>>, %arg1: memref<8x128xf32, #tpu.memory_space<vmem>>, %arg2: memref<32x128xf32, #tpu.memory_space<vmem>>, %arg3: memref<1x128xf32, #tpu.memory_space<vmem>>, %arg4: memref<1x128xf32, #tpu.memory_space<vmem>>, %arg5: memref<1x128xf32, #tpu.memory_space<vmem>>, %arg6: memref<8x96xf32, #tpu.memory_space<vmem>>, %arg7: memref<1x96xf32, #tpu.memory_space<vmem>>, %arg8: memref<2x64x64xf32, #tpu.memory_space<vmem>>, %arg9: memref<2x1x64xf32, #tpu.memory_space<vmem>>, %arg10: memref<2x1x64xf32, #tpu.memory_space<vmem>>, %arg11: memref<2x1x64xf32, #tpu.memory_space<vmem>>, %arg12: memref<8x128xf32, #tpu.memory_space<vmem>>, %arg13: memref<64x128xf32, #tpu.memory_space<vmem>>) attributes {dimension_semantics = [], scalar_prefetch = 0 : i64, scratch_operands = 1 : i64, tpu.core_type = #tpu.core_type<tc>} {
    %c0 = arith.constant 0 : index
    %c0_0 = arith.constant 0 : index
    %0 = vector.load %arg0[%c0, %c0_0] : memref<64x8xf32, #tpu.memory_space<vmem>>, vector<64x8xf32>
    %c0_1 = arith.constant 0 : index
    %c0_2 = arith.constant 0 : index
    %1 = vector.load %arg1[%c0_1, %c0_2] : memref<8x128xf32, #tpu.memory_space<vmem>>, vector<8x128xf32>
    %cst = arith.constant dense<0.000000e+00> : vector<64x128xf32>
    %2 = tpu.matmul %0, %1, %cst {dimension_numbers = #tpu.dot_dimension_numbers<[1], [0], [0], [1], [0, 0, 1, 1], [], []>} : vector<64x8xf32>, vector<8x128xf32>, vector<64x128xf32> -> vector<64x128xf32>
    %c0_3 = arith.constant 0 : index
    %c0_4 = arith.constant 0 : index
    %3 = vector.load %arg3[%c0_3, %c0_4] : memref<1x128xf32, #tpu.memory_space<vmem>>, vector<1x128xf32>
    %4 = vector.broadcast %3 : vector<1x128xf32> to vector<64x128xf32>
    %5 = arith.addf %2, %4 : vector<64x128xf32>
    %c0_5 = arith.constant 0 : index
    %c0_6 = arith.constant 0 : index
    %6 = vector.load %arg13[%c0_5, %c0_6] : memref<64x128xf32, #tpu.memory_space<vmem>>, vector<64x128xf32>
    tpu.vector_store %arg13[%c0_5, %c0_6], %5 {strides = array<i32>} : memref<64x128xf32, #tpu.memory_space<vmem>>, vector<64x128xf32>,
    %c0_7 = arith.constant 0 : index
    %c0_8 = arith.constant 0 : index
    %7 = vector.load %arg2[%c0_7, %c0_8] : memref<32x128xf32, #tpu.memory_space<vmem>>, vector<32x128xf32>
    %c0_9 = arith.constant 0 : index
    %c0_10 = arith.constant 0 : index
    %8 = vector.load %arg4[%c0_9, %c0_10] : memref<1x128xf32, #tpu.memory_space<vmem>>, vector<1x128xf32>
    %9 = vector.shape_cast %8 : vector<1x128xf32> to vector<1x128xf32>
    %10 = vector.broadcast %9 : vector<1x128xf32> to vector<8x128xf32>
    %c0_11 = arith.constant 0 : index
    %c0_12 = arith.constant 0 : index
    %11 = vector.load %arg5[%c0_11, %c0_12] : memref<1x128xf32, #tpu.memory_space<vmem>>, vector<1x128xf32>
    %12 = vector.shape_cast %11 : vector<1x128xf32> to vector<1x128xf32>
    %13 = vector.broadcast %12 : vector<1x128xf32> to vector<8x128xf32>
    %cst_13 = arith.constant 0.000000e+00 : f32
    %14 = vector.broadcast %cst_13 : f32 to vector<8x32xf32>
    %cst_14 = arith.constant 0.000000e+00 : f32
    %15 = vector.broadcast %cst_14 : f32 to vector<8x32xf32>
    %c0_15 = arith.constant 0 : index
    %c0_16 = arith.constant 0 : index
    %16 = vector.load %arg13[%c0_15, %c0_16] : memref<64x128xf32, #tpu.memory_space<vmem>>, vector<8x128xf32>
    %cst_17 = arith.constant dense<0.000000e+00> : vector<8x128xf32>
    %17 = tpu.matmul %14, %7, %cst_17 {dimension_numbers = #tpu.dot_dimension_numbers<[1], [0], [0], [1], [0, 0, 1, 1], [], []>} : vector<8x32xf32>, vector<32x128xf32>, vector<8x128xf32> -> vector<8x128xf32>
    %18 = arith.addf %16, %17 : vector<8x128xf32>
    %19 = math.tanh %18 : vector<8x128xf32>
    %20 = arith.mulf %19, %10 : vector<8x128xf32>
    %21 = arith.addf %20, %13 : vector<8x128xf32>
    %22 = vector.extract_strided_slice %21 {offsets = [0, 0], sizes = [8, 32], strides = [1, 1]} : vector<8x128xf32> to vector<8x32xf32>
    %23 = vector.extract_strided_slice %21 {offsets = [0, 32], sizes = [8, 32], strides = [1, 1]} : vector<8x128xf32> to vector<8x32xf32>
    %24 = vector.extract_strided_slice %21 {offsets = [0, 64], sizes = [8, 32], strides = [1, 1]} : vector<8x128xf32> to vector<8x32xf32>
    %25 = vector.extract_strided_slice %21 {offsets = [0, 96], sizes = [8, 32], strides = [1, 1]} : vector<8x128xf32> to vector<8x32xf32>
    %26 = arith.mulf %23, %15 : vector<8x32xf32>
    %27 = arith.mulf %22, %24 : vector<8x32xf32>
    %28 = arith.addf %26, %27 : vector<8x32xf32>
    %29 = math.tanh %28 : vector<8x32xf32>
    %30 = arith.mulf %25, %29 : vector<8x32xf32>
    %c8 = arith.constant 8 : index
    %c0_18 = arith.constant 0 : index
    %31 = vector.load %arg13[%c8, %c0_18] : memref<64x128xf32, #tpu.memory_space<vmem>>, vector<8x128xf32>
    %cst_19 = arith.constant dense<0.000000e+00> : vector<8x128xf32>
    %32 = tpu.matmul %30, %7, %cst_19 {dimension_numbers = #tpu.dot_dimension_numbers<[1], [0], [0], [1], [0, 0, 1, 1], [], []>} : vector<8x32xf32>, vector<32x128xf32>, vector<8x128xf32> -> vector<8x128xf32>
    %33 = arith.addf %31, %32 : vector<8x128xf32>
    %34 = math.tanh %33 : vector<8x128xf32>
    %35 = arith.mulf %34, %10 : vector<8x128xf32>
    %36 = arith.addf %35, %13 : vector<8x128xf32>
    %37 = vector.extract_strided_slice %36 {offsets = [0, 0], sizes = [8, 32], strides = [1, 1]} : vector<8x128xf32> to vector<8x32xf32>
    %38 = vector.extract_strided_slice %36 {offsets = [0, 32], sizes = [8, 32], strides = [1, 1]} : vector<8x128xf32> to vector<8x32xf32>
    %39 = vector.extract_strided_slice %36 {offsets = [0, 64], sizes = [8, 32], strides = [1, 1]} : vector<8x128xf32> to vector<8x32xf32>
    %40 = vector.extract_strided_slice %36 {offsets = [0, 96], sizes = [8, 32], strides = [1, 1]} : vector<8x128xf32> to vector<8x32xf32>
    %41 = arith.mulf %38, %28 : vector<8x32xf32>
    %42 = arith.mulf %37, %39 : vector<8x32xf32>
    %43 = arith.addf %41, %42 : vector<8x32xf32>
    %44 = math.tanh %43 : vector<8x32xf32>
    %45 = arith.mulf %40, %44 : vector<8x32xf32>
    %c16 = arith.constant 16 : index
    %c0_20 = arith.constant 0 : index
    %46 = vector.load %arg13[%c16, %c0_20] : memref<64x128xf32, #tpu.memory_space<vmem>>, vector<8x128xf32>
    %cst_21 = arith.constant dense<0.000000e+00> : vector<8x128xf32>
    %47 = tpu.matmul %45, %7, %cst_21 {dimension_numbers = #tpu.dot_dimension_numbers<[1], [0], [0], [1], [0, 0, 1, 1], [], []>} : vector<8x32xf32>, vector<32x128xf32>, vector<8x128xf32> -> vector<8x128xf32>
    %48 = arith.addf %46, %47 : vector<8x128xf32>
    %49 = math.tanh %48 : vector<8x128xf32>
    %50 = arith.mulf %49, %10 : vector<8x128xf32>
    %51 = arith.addf %50, %13 : vector<8x128xf32>
    %52 = vector.extract_strided_slice %51 {offsets = [0, 0], sizes = [8, 32], strides = [1, 1]} : vector<8x128xf32> to vector<8x32xf32>
    %53 = vector.extract_strided_slice %51 {offsets = [0, 32], sizes = [8, 32], strides = [1, 1]} : vector<8x128xf32> to vector<8x32xf32>
    %54 = vector.extract_strided_slice %51 {offsets = [0, 64], sizes = [8, 32], strides = [1, 1]} : vector<8x128xf32> to vector<8x32xf32>
    %55 = vector.extract_strided_slice %51 {offsets = [0, 96], sizes = [8, 32], strides = [1, 1]} : vector<8x128xf32> to vector<8x32xf32>
    %56 = arith.mulf %53, %43 : vector<8x32xf32>
    %57 = arith.mulf %52, %54 : vector<8x32xf32>
    %58 = arith.addf %56, %57 : vector<8x32xf32>
    %59 = math.tanh %58 : vector<8x32xf32>
    %60 = arith.mulf %55, %59 : vector<8x32xf32>
    %c24 = arith.constant 24 : index
    %c0_22 = arith.constant 0 : index
    %61 = vector.load %arg13[%c24, %c0_22] : memref<64x128xf32, #tpu.memory_space<vmem>>, vector<8x128xf32>
    %cst_23 = arith.constant dense<0.000000e+00> : vector<8x128xf32>
    %62 = tpu.matmul %60, %7, %cst_23 {dimension_numbers = #tpu.dot_dimension_numbers<[1], [0], [0], [1], [0, 0, 1, 1], [], []>} : vector<8x32xf32>, vector<32x128xf32>, vector<8x128xf32> -> vector<8x128xf32>
    %63 = arith.addf %61, %62 : vector<8x128xf32>
    %64 = math.tanh %63 : vector<8x128xf32>
    %65 = arith.mulf %64, %10 : vector<8x128xf32>
    %66 = arith.addf %65, %13 : vector<8x128xf32>
    %67 = vector.extract_strided_slice %66 {offsets = [0, 0], sizes = [8, 32], strides = [1, 1]} : vector<8x128xf32> to vector<8x32xf32>
    %68 = vector.extract_strided_slice %66 {offsets = [0, 32], sizes = [8, 32], strides = [1, 1]} : vector<8x128xf32> to vector<8x32xf32>
    %69 = vector.extract_strided_slice %66 {offsets = [0, 64], sizes = [8, 32], strides = [1, 1]} : vector<8x128xf32> to vector<8x32xf32>
    %70 = vector.extract_strided_slice %66 {offsets = [0, 96], sizes = [8, 32], strides = [1, 1]} : vector<8x128xf32> to vector<8x32xf32>
    %71 = arith.mulf %68, %58 : vector<8x32xf32>
    %72 = arith.mulf %67, %69 : vector<8x32xf32>
    %73 = arith.addf %71, %72 : vector<8x32xf32>
    %74 = math.tanh %73 : vector<8x32xf32>
    %75 = arith.mulf %70, %74 : vector<8x32xf32>
    %c32 = arith.constant 32 : index
    %c0_24 = arith.constant 0 : index
    %76 = vector.load %arg13[%c32, %c0_24] : memref<64x128xf32, #tpu.memory_space<vmem>>, vector<8x128xf32>
    %cst_25 = arith.constant dense<0.000000e+00> : vector<8x128xf32>
    %77 = tpu.matmul %75, %7, %cst_25 {dimension_numbers = #tpu.dot_dimension_numbers<[1], [0], [0], [1], [0, 0, 1, 1], [], []>} : vector<8x32xf32>, vector<32x128xf32>, vector<8x128xf32> -> vector<8x128xf32>
    %78 = arith.addf %76, %77 : vector<8x128xf32>
    %79 = math.tanh %78 : vector<8x128xf32>
    %80 = arith.mulf %79, %10 : vector<8x128xf32>
    %81 = arith.addf %80, %13 : vector<8x128xf32>
    %82 = vector.extract_strided_slice %81 {offsets = [0, 0], sizes = [8, 32], strides = [1, 1]} : vector<8x128xf32> to vector<8x32xf32>
    %83 = vector.extract_strided_slice %81 {offsets = [0, 32], sizes = [8, 32], strides = [1, 1]} : vector<8x128xf32> to vector<8x32xf32>
    %84 = vector.extract_strided_slice %81 {offsets = [0, 64], sizes = [8, 32], strides = [1, 1]} : vector<8x128xf32> to vector<8x32xf32>
    %85 = vector.extract_strided_slice %81 {offsets = [0, 96], sizes = [8, 32], strides = [1, 1]} : vector<8x128xf32> to vector<8x32xf32>
    %86 = arith.mulf %83, %73 : vector<8x32xf32>
    %87 = arith.mulf %82, %84 : vector<8x32xf32>
    %88 = arith.addf %86, %87 : vector<8x32xf32>
    %89 = math.tanh %88 : vector<8x32xf32>
    %90 = arith.mulf %85, %89 : vector<8x32xf32>
    %c40 = arith.constant 40 : index
    %c0_26 = arith.constant 0 : index
    %91 = vector.load %arg13[%c40, %c0_26] : memref<64x128xf32, #tpu.memory_space<vmem>>, vector<8x128xf32>
    %cst_27 = arith.constant dense<0.000000e+00> : vector<8x128xf32>
    %92 = tpu.matmul %90, %7, %cst_27 {dimension_numbers = #tpu.dot_dimension_numbers<[1], [0], [0], [1], [0, 0, 1, 1], [], []>} : vector<8x32xf32>, vector<32x128xf32>, vector<8x128xf32> -> vector<8x128xf32>
    %93 = arith.addf %91, %92 : vector<8x128xf32>
    %94 = math.tanh %93 : vector<8x128xf32>
    %95 = arith.mulf %94, %10 : vector<8x128xf32>
    %96 = arith.addf %95, %13 : vector<8x128xf32>
    %97 = vector.extract_strided_slice %96 {offsets = [0, 0], sizes = [8, 32], strides = [1, 1]} : vector<8x128xf32> to vector<8x32xf32>
    %98 = vector.extract_strided_slice %96 {offsets = [0, 32], sizes = [8, 32], strides = [1, 1]} : vector<8x128xf32> to vector<8x32xf32>
    %99 = vector.extract_strided_slice %96 {offsets = [0, 64], sizes = [8, 32], strides = [1, 1]} : vector<8x128xf32> to vector<8x32xf32>
    %100 = vector.extract_strided_slice %96 {offsets = [0, 96], sizes = [8, 32], strides = [1, 1]} : vector<8x128xf32> to vector<8x32xf32>
    %101 = arith.mulf %98, %88 : vector<8x32xf32>
    %102 = arith.mulf %97, %99 : vector<8x32xf32>
    %103 = arith.addf %101, %102 : vector<8x32xf32>
    %104 = math.tanh %103 : vector<8x32xf32>
    %105 = arith.mulf %100, %104 : vector<8x32xf32>
    %c48 = arith.constant 48 : index
    %c0_28 = arith.constant 0 : index
    %106 = vector.load %arg13[%c48, %c0_28] : memref<64x128xf32, #tpu.memory_space<vmem>>, vector<8x128xf32>
    %cst_29 = arith.constant dense<0.000000e+00> : vector<8x128xf32>
    %107 = tpu.matmul %105, %7, %cst_29 {dimension_numbers = #tpu.dot_dimension_numbers<[1], [0], [0], [1], [0, 0, 1, 1], [], []>} : vector<8x32xf32>, vector<32x128xf32>, vector<8x128xf32> -> vector<8x128xf32>
    %108 = arith.addf %106, %107 : vector<8x128xf32>
    %109 = math.tanh %108 : vector<8x128xf32>
    %110 = arith.mulf %109, %10 : vector<8x128xf32>
    %111 = arith.addf %110, %13 : vector<8x128xf32>
    %112 = vector.extract_strided_slice %111 {offsets = [0, 0], sizes = [8, 32], strides = [1, 1]} : vector<8x128xf32> to vector<8x32xf32>
    %113 = vector.extract_strided_slice %111 {offsets = [0, 32], sizes = [8, 32], strides = [1, 1]} : vector<8x128xf32> to vector<8x32xf32>
    %114 = vector.extract_strided_slice %111 {offsets = [0, 64], sizes = [8, 32], strides = [1, 1]} : vector<8x128xf32> to vector<8x32xf32>
    %115 = vector.extract_strided_slice %111 {offsets = [0, 96], sizes = [8, 32], strides = [1, 1]} : vector<8x128xf32> to vector<8x32xf32>
    %116 = arith.mulf %113, %103 : vector<8x32xf32>
    %117 = arith.mulf %112, %114 : vector<8x32xf32>
    %118 = arith.addf %116, %117 : vector<8x32xf32>
    %119 = math.tanh %118 : vector<8x32xf32>
    %120 = arith.mulf %115, %119 : vector<8x32xf32>
    %c56 = arith.constant 56 : index
    %c0_30 = arith.constant 0 : index
    %121 = vector.load %arg13[%c56, %c0_30] : memref<64x128xf32, #tpu.memory_space<vmem>>, vector<8x128xf32>
    %cst_31 = arith.constant dense<0.000000e+00> : vector<8x128xf32>
    %122 = tpu.matmul %120, %7, %cst_31 {dimension_numbers = #tpu.dot_dimension_numbers<[1], [0], [0], [1], [0, 0, 1, 1], [], []>} : vector<8x32xf32>, vector<32x128xf32>, vector<8x128xf32> -> vector<8x128xf32>
    %123 = arith.addf %121, %122 : vector<8x128xf32>
    %124 = math.tanh %123 : vector<8x128xf32>
    %125 = arith.mulf %124, %10 : vector<8x128xf32>
    %126 = arith.addf %125, %13 : vector<8x128xf32>
    %127 = vector.extract_strided_slice %126 {offsets = [0, 0], sizes = [8, 32], strides = [1, 1]} : vector<8x128xf32> to vector<8x32xf32>
    %128 = vector.extract_strided_slice %126 {offsets = [0, 32], sizes = [8, 32], strides = [1, 1]} : vector<8x128xf32> to vector<8x32xf32>
    %129 = vector.extract_strided_slice %126 {offsets = [0, 64], sizes = [8, 32], strides = [1, 1]} : vector<8x128xf32> to vector<8x32xf32>
    %130 = vector.extract_strided_slice %126 {offsets = [0, 96], sizes = [8, 32], strides = [1, 1]} : vector<8x128xf32> to vector<8x32xf32>
    %131 = arith.mulf %128, %118 : vector<8x32xf32>
    %132 = arith.mulf %127, %129 : vector<8x32xf32>
    %133 = arith.addf %131, %132 : vector<8x32xf32>
    %134 = math.tanh %133 : vector<8x32xf32>
    %135 = arith.mulf %130, %134 : vector<8x32xf32>
    %c56_32 = arith.constant 56 : index
    %c0_33 = arith.constant 0 : index
    %136 = vector.load %arg0[%c56_32, %c0_33] : memref<64x8xf32, #tpu.memory_space<vmem>>, vector<8x8xf32>
    %c0_34 = arith.constant 0 : index
    %c0_35 = arith.constant 0 : index
    %137 = vector.load %arg6[%c0_34, %c0_35] : memref<8x96xf32, #tpu.memory_space<vmem>>, vector<8x96xf32>
    %cst_36 = arith.constant dense<0.000000e+00> : vector<8x96xf32>
    %138 = tpu.matmul %136, %137, %cst_36 {dimension_numbers = #tpu.dot_dimension_numbers<[1], [0], [0], [1], [0, 0, 1, 1], [], []>} : vector<8x8xf32>, vector<8x96xf32>, vector<8x96xf32> -> vector<8x96xf32>
    %c0_37 = arith.constant 0 : index
    %c0_38 = arith.constant 0 : index
    %139 = vector.load %arg7[%c0_37, %c0_38] : memref<1x96xf32, #tpu.memory_space<vmem>>, vector<1x96xf32>
    %140 = vector.broadcast %139 : vector<1x96xf32> to vector<8x96xf32>
    %141 = arith.addf %138, %140 : vector<8x96xf32>
    %142 = vector.extract_strided_slice %141 {offsets = [0, 0], sizes = [8, 32], strides = [1, 1]} : vector<8x96xf32> to vector<8x32xf32>
    %143 = arith.negf %142 : vector<8x32xf32>
    %144 = math.exp %143 : vector<8x32xf32>
    %cst_39 = arith.constant 1.000000e+00 : f32
    %145 = vector.broadcast %cst_39 : f32 to vector<8x32xf32>
    %146 = arith.addf %145, %144 : vector<8x32xf32>
    %147 = arith.divf %145, %146 : vector<8x32xf32>
    %148 = vector.extract_strided_slice %141 {offsets = [0, 32], sizes = [8, 32], strides = [1, 1]} : vector<8x96xf32> to vector<8x32xf32>
    %149 = math.tanh %148 : vector<8x32xf32>
    %150 = vector.extract_strided_slice %141 {offsets = [0, 64], sizes = [8, 32], strides = [1, 1]} : vector<8x96xf32> to vector<8x32xf32>
    %151 = arith.negf %150 : vector<8x32xf32>
    %152 = math.exp %151 : vector<8x32xf32>
    %cst_40 = arith.constant 1.000000e+00 : f32
    %153 = vector.broadcast %cst_40 : f32 to vector<8x32xf32>
    %154 = arith.addf %153, %152 : vector<8x32xf32>
    %155 = arith.divf %153, %154 : vector<8x32xf32>
    %156 = arith.mulf %147, %149 : vector<8x32xf32>
    %157 = math.tanh %156 : vector<8x32xf32>
    %158 = arith.mulf %155, %157 : vector<8x32xf32>
    %159 = tpu.concatenate %135, %158 in 1 : vector<8x32xf32>, vector<8x32xf32> -> vector<8x64xf32>
    %c0_41 = arith.constant 0 : index
    %c0_42 = arith.constant 0 : index
    %c0_43 = arith.constant 0 : index
    %160 = vector.load %arg8[%c0_41, %c0_42, %c0_43] : memref<2x64x64xf32, #tpu.memory_space<vmem>>, vector<1x64x64xf32>
    %161 = vector.shape_cast %160 : vector<1x64x64xf32> to vector<64x64xf32>
    %cst_44 = arith.constant dense<0.000000e+00> : vector<8x64xf32>
    %162 = tpu.matmul %159, %161, %cst_44 {dimension_numbers = #tpu.dot_dimension_numbers<[1], [0], [0], [1], [0, 0, 1, 1], [], []>} : vector<8x64xf32>, vector<64x64xf32>, vector<8x64xf32> -> vector<8x64xf32>
    %c0_45 = arith.constant 0 : index
    %c0_46 = arith.constant 0 : index
    %c0_47 = arith.constant 0 : index
    %163 = vector.load %arg9[%c0_45, %c0_46, %c0_47] : memref<2x1x64xf32, #tpu.memory_space<vmem>>, vector<1x1x64xf32>
    %164 = vector.shape_cast %163 : vector<1x1x64xf32> to vector<1x64xf32>
    %165 = vector.broadcast %164 : vector<1x64xf32> to vector<8x64xf32>
    %166 = arith.addf %162, %165 : vector<8x64xf32>
    %cst_48 = arith.constant dense<0.000000e+00> : vector<8xf32>
    %167 = vector.multi_reduction <add>, %166, %cst_48 [1] : vector<8x64xf32> to vector<8xf32>
    %168 = vector.shape_cast %167 : vector<8xf32> to vector<8x1xf32>
    %cst_49 = arith.constant 6.400000e+01 : f32
    %169 = vector.broadcast %cst_49 : f32 to vector<8x1xf32>
    %170 = arith.divf %168, %169 : vector<8x1xf32>
    %171 = vector.broadcast %170 : vector<8x1xf32> to vector<8x64xf32>
    %172 = arith.subf %166, %171 : vector<8x64xf32>
    %173 = arith.mulf %172, %172 : vector<8x64xf32>
    %cst_50 = arith.constant dense<0.000000e+00> : vector<8xf32>
    %174 = vector.multi_reduction <add>, %173, %cst_50 [1] : vector<8x64xf32> to vector<8xf32>
    %175 = vector.shape_cast %174 : vector<8xf32> to vector<8x1xf32>
    %cst_51 = arith.constant 6.400000e+01 : f32
    %176 = vector.broadcast %cst_51 : f32 to vector<8x1xf32>
    %177 = arith.divf %175, %176 : vector<8x1xf32>
    %178 = vector.broadcast %170 : vector<8x1xf32> to vector<8x64xf32>
    %179 = arith.subf %166, %178 : vector<8x64xf32>
    %cst_52 = arith.constant 9.99999974E-6 : f32
    %180 = vector.broadcast %cst_52 : f32 to vector<8x1xf32>
    %181 = arith.addf %177, %180 : vector<8x1xf32>
    %182 = math.rsqrt %181 : vector<8x1xf32>
    %183 = vector.broadcast %182 : vector<8x1xf32> to vector<8x64xf32>
    %184 = arith.mulf %179, %183 : vector<8x64xf32>
    %c0_53 = arith.constant 0 : index
    %c0_54 = arith.constant 0 : index
    %c0_55 = arith.constant 0 : index
    %185 = vector.load %arg10[%c0_53, %c0_54, %c0_55] : memref<2x1x64xf32, #tpu.memory_space<vmem>>, vector<1x1x64xf32>
    %186 = vector.shape_cast %185 : vector<1x1x64xf32> to vector<1x64xf32>
    %187 = vector.broadcast %186 : vector<1x64xf32> to vector<8x64xf32>
    %188 = arith.mulf %184, %187 : vector<8x64xf32>
    %c0_56 = arith.constant 0 : index
    %c0_57 = arith.constant 0 : index
    %c0_58 = arith.constant 0 : index
    %189 = vector.load %arg11[%c0_56, %c0_57, %c0_58] : memref<2x1x64xf32, #tpu.memory_space<vmem>>, vector<1x1x64xf32>
    %190 = vector.shape_cast %189 : vector<1x1x64xf32> to vector<1x64xf32>
    %191 = vector.broadcast %190 : vector<1x64xf32> to vector<8x64xf32>
    %192 = arith.addf %188, %191 : vector<8x64xf32>
    %cst_59 = arith.constant 0.000000e+00 : f32
    %193 = vector.broadcast %cst_59 : f32 to vector<8x64xf32>
    %194 = arith.maximumf %192, %193 : vector<8x64xf32>
    %195 = arith.addf %159, %194 : vector<8x64xf32>
    %c1 = arith.constant 1 : index
    %c0_60 = arith.constant 0 : index
    %c0_61 = arith.constant 0 : index
    %196 = vector.load %arg8[%c1, %c0_60, %c0_61] : memref<2x64x64xf32, #tpu.memory_space<vmem>>, vector<1x64x64xf32>
    %197 = vector.shape_cast %196 : vector<1x64x64xf32> to vector<64x64xf32>
    %cst_62 = arith.constant dense<0.000000e+00> : vector<8x64xf32>
    %198 = tpu.matmul %195, %197, %cst_62 {dimension_numbers = #tpu.dot_dimension_numbers<[1], [0], [0], [1], [0, 0, 1, 1], [], []>} : vector<8x64xf32>, vector<64x64xf32>, vector<8x64xf32> -> vector<8x64xf32>
    %c1_63 = arith.constant 1 : index
    %c0_64 = arith.constant 0 : index
    %c0_65 = arith.constant 0 : index
    %199 = vector.load %arg9[%c1_63, %c0_64, %c0_65] : memref<2x1x64xf32, #tpu.memory_space<vmem>>, vector<1x1x64xf32>
    %200 = vector.shape_cast %199 : vector<1x1x64xf32> to vector<1x64xf32>
    %201 = vector.broadcast %200 : vector<1x64xf32> to vector<8x64xf32>
    %202 = arith.addf %198, %201 : vector<8x64xf32>
    %cst_66 = arith.constant dense<0.000000e+00> : vector<8xf32>
    %203 = vector.multi_reduction <add>, %202, %cst_66 [1] : vector<8x64xf32> to vector<8xf32>
    %204 = vector.shape_cast %203 : vector<8xf32> to vector<8x1xf32>
    %cst_67 = arith.constant 6.400000e+01 : f32
    %205 = vector.broadcast %cst_67 : f32 to vector<8x1xf32>
    %206 = arith.divf %204, %205 : vector<8x1xf32>
    %207 = vector.broadcast %206 : vector<8x1xf32> to vector<8x64xf32>
    %208 = arith.subf %202, %207 : vector<8x64xf32>
    %209 = arith.mulf %208, %208 : vector<8x64xf32>
    %cst_68 = arith.constant dense<0.000000e+00> : vector<8xf32>
    %210 = vector.multi_reduction <add>, %209, %cst_68 [1] : vector<8x64xf32> to vector<8xf32>
    %211 = vector.shape_cast %210 : vector<8xf32> to vector<8x1xf32>
    %cst_69 = arith.constant 6.400000e+01 : f32
    %212 = vector.broadcast %cst_69 : f32 to vector<8x1xf32>
    %213 = arith.divf %211, %212 : vector<8x1xf32>
    %214 = vector.broadcast %206 : vector<8x1xf32> to vector<8x64xf32>
    %215 = arith.subf %202, %214 : vector<8x64xf32>
    %cst_70 = arith.constant 9.99999974E-6 : f32
    %216 = vector.broadcast %cst_70 : f32 to vector<8x1xf32>
    %217 = arith.addf %213, %216 : vector<8x1xf32>
    %218 = math.rsqrt %217 : vector<8x1xf32>
    %219 = vector.broadcast %218 : vector<8x1xf32> to vector<8x64xf32>
    %220 = arith.mulf %215, %219 : vector<8x64xf32>
    %c1_71 = arith.constant 1 : index
    %c0_72 = arith.constant 0 : index
    %c0_73 = arith.constant 0 : index
    %221 = vector.load %arg10[%c1_71, %c0_72, %c0_73] : memref<2x1x64xf32, #tpu.memory_space<vmem>>, vector<1x1x64xf32>
    %222 = vector.shape_cast %221 : vector<1x1x64xf32> to vector<1x64xf32>
    %223 = vector.broadcast %222 : vector<1x64xf32> to vector<8x64xf32>
    %224 = arith.mulf %220, %223 : vector<8x64xf32>
    %c1_74 = arith.constant 1 : index
    %c0_75 = arith.constant 0 : index
    %c0_76 = arith.constant 0 : index
    %225 = vector.load %arg11[%c1_74, %c0_75, %c0_76] : memref<2x1x64xf32, #tpu.memory_space<vmem>>, vector<1x1x64xf32>
    %226 = vector.shape_cast %225 : vector<1x1x64xf32> to vector<1x64xf32>
    %227 = vector.broadcast %226 : vector<1x64xf32> to vector<8x64xf32>
    %228 = arith.addf %224, %227 : vector<8x64xf32>
    %cst_77 = arith.constant 0.000000e+00 : f32
    %229 = vector.broadcast %cst_77 : f32 to vector<8x64xf32>
    %230 = arith.maximumf %228, %229 : vector<8x64xf32>
    %231 = arith.addf %195, %230 : vector<8x64xf32>
    %cst_78 = arith.constant 0.000000e+00 : f32
    %232 = vector.broadcast %cst_78 : f32 to vector<8x64xf32>
    %233 = tpu.concatenate %231, %232 in 1 : vector<8x64xf32>, vector<8x64xf32> -> vector<8x128xf32>
    %c0_79 = arith.constant 0 : index
    %c0_80 = arith.constant 0 : index
    %234 = vector.load %arg12[%c0_79, %c0_80] : memref<8x128xf32, #tpu.memory_space<vmem>>, vector<8x128xf32>
    tpu.vector_store %arg12[%c0_79, %c0_80], %233 {strides = array<i32>} : memref<8x128xf32, #tpu.memory_space<vmem>>, vector<8x128xf32>,
    return
  }
}

</mosaic_0001>

<llo_original>
// kernel: market_encoder_forward.1
$region0: #{market_encoder_forward.1}
  #allocation0 [shape = 'u32[]', space=smem, size = 0x4, offset = 0x4, fixed_abs, tag = 'smem constant byte address 0x4 - core index']
  #allocation1 [shape = 'u32[144,128]{1,0:T(1,128)}', space=vmem, size = 0x12000, scoped, tag = 'internal scratch']
  #allocation2 [shape = 'f32[64,128]{1,0:T(8,128)}', space=vmem, size = 0x8000, scoped, tag = 'scratch operand']
  %s0 = inlined_call_operand.vmem [shape: f32[64,8], index: 0, kind: input, shape index: {}]
  %s1 = inlined_call_operand.vmem [shape: f32[8,128], index: 1, kind: input, shape index: {}]
  %s2 = inlined_call_operand.vmem [shape: f32[32,128], index: 2, kind: input, shape index: {}]
  %s3 = inlined_call_operand.vmem [shape: f32[1,128], index: 3, kind: input, shape index: {}]
  %s4 = inlined_call_operand.vmem [shape: f32[1,128], index: 4, kind: input, shape index: {}]
  %s5 = inlined_call_operand.vmem [shape: f32[1,128], index: 5, kind: input, shape index: {}]
  %s6 = inlined_call_operand.vmem [shape: f32[8,96], index: 6, kind: input, shape index: {}]
  %s7 = inlined_call_operand.vmem [shape: f32[1,96], index: 7, kind: input, shape index: {}]
  %s8 = inlined_call_operand.vmem [shape: f32[2,64,64], index: 8, kind: input, shape index: {}]
  %s9 = inlined_call_operand.vmem [shape: f32[2,1,64], index: 9, kind: input, shape index: {}]
  %s10 = inlined_call_operand.vmem [shape: f32[2,1,64], index: 10, kind: input, shape index: {}]
  %s11 = inlined_call_operand.vmem [shape: f32[2,1,64], index: 11, kind: input, shape index: {}]
  %s12 = inlined_call_operand.vmem [shape: f32[8,128], index: 12, kind: output, shape index: {}]
  %s13 = sld [smem:[#allocation0]]
  $region58: #{market_encoder_forward.1} parent=0
    _
  %s15 = ssub.s32 1, %s13
  %s16 = scalar_select 0, %s15, %s13
  // Predicated region
  $region2: #{market_encoder_forward.1} parent=0 // pred_check
    _
  $region3: #{market_encoder_forward.1} parent=0 // pred_check_branch
    %18 = sbr.rel (0) target = $region5
  $region4: #{market_encoder_forward.1} parent=0 // pred_region
    _
  $region5: #{market_encoder_forward.1} parent=0 // pred_fallthru
    _
  // Predicated region
  $region6: #{market_encoder_forward.1} parent=0 // pred_check
    _
  $region7: #{market_encoder_forward.1} parent=0 // pred_check_branch
    %20 = sbr.rel (0) target = $region9
  $region8: #{market_encoder_forward.1} parent=0 // pred_region
    _
  $region9: #{market_encoder_forward.1} parent=0 // pred_fallthru
    _
  // Predicated region
  $region10: #{market_encoder_forward.1} parent=0 // pred_check
    _
  $region11: #{market_encoder_forward.1} parent=0 // pred_check_branch
    %22 = sbr.rel (0) target = $region13
  $region12: #{market_encoder_forward.1} parent=0 // pred_region
    _
  $region13: #{market_encoder_forward.1} parent=0 // pred_fallthru
    _
  // Predicated region
  $region14: #{market_encoder_forward.1} parent=0 // pred_check
    _
  $region15: #{market_encoder_forward.1} parent=0 // pred_check_branch
    %24 = sbr.rel (0) target = $region17
  $region16: #{market_encoder_forward.1} parent=0 // pred_region
    _
  $region17: #{market_encoder_forward.1} parent=0 // pred_fallthru
    _
  // Predicated region
  $region18: #{market_encoder_forward.1} parent=0 // pred_check
    _
  $region19: #{market_encoder_forward.1} parent=0 // pred_check_branch
    %26 = sbr.rel (0) target = $region21
  $region20: #{market_encoder_forward.1} parent=0 // pred_region
    _
  $region21: #{market_encoder_forward.1} parent=0 // pred_fallthru
    _
  // Predicated region
  $region22: #{market_encoder_forward.1} parent=0 // pred_check
    _
  $region23: #{market_encoder_forward.1} parent=0 // pred_check_branch
    %28 = sbr.rel (0) target = $region25
  $region24: #{market_encoder_forward.1} parent=0 // pred_region
    _
  $region25: #{market_encoder_forward.1} parent=0 // pred_fallthru
    _
  // Predicated region
  $region26: #{market_encoder_forward.1} parent=0 // pred_check
    _
  $region27: #{market_encoder_forward.1} parent=0 // pred_check_branch
    %30 = sbr.rel (0) target = $region29
  $region28: #{market_encoder_forward.1} parent=0 // pred_region
    _
  $region29: #{market_encoder_forward.1} parent=0 // pred_fallthru
    _
  // Predicated region
  $region30: #{market_encoder_forward.1} parent=0 // pred_check
    _
  $region31: #{market_encoder_forward.1} parent=0 // pred_check_branch
    %32 = sbr.rel (0) target = $region33
  $region32: #{market_encoder_forward.1} parent=0 // pred_region
    _
  $region33: #{market_encoder_forward.1} parent=0 // pred_fallthru
    _
  // Predicated region
  $region34: #{market_encoder_forward.1} parent=0 // pred_check
    _
  $region35: #{market_encoder_forward.1} parent=0 // pred_check_branch
    %34 = sbr.rel (0) target = $region37
  $region36: #{market_encoder_forward.1} parent=0 // pred_region
    _
  $region37: #{market_encoder_forward.1} parent=0 // pred_fallthru
    _
  // Predicated region
  $region38: #{market_encoder_forward.1} parent=0 // pred_check
    _
  $region39: #{market_encoder_forward.1} parent=0 // pred_check_branch
    %36 = sbr.rel (0) target = $region41
  $region40: #{market_encoder_forward.1} parent=0 // pred_region
    _
  $region41: #{market_encoder_forward.1} parent=0 // pred_fallthru
    _
  // Predicated region
  $region42: #{market_encoder_forward.1} parent=0 // pred_check
    _
  $region43: #{market_encoder_forward.1} parent=0 // pred_check_branch
    %38 = sbr.rel (0) target = $region45
  $region44: #{market_encoder_forward.1} parent=0 // pred_region
    _
  $region45: #{market_encoder_forward.1} parent=0 // pred_fallthru
    _
  // Predicated region
  $region46: #{market_encoder_forward.1} parent=0 // pred_check
    _
  $region47: #{market_encoder_forward.1} parent=0 // pred_check_branch
    %40 = sbr.rel (0) target = $region49
  $region48: #{market_encoder_forward.1} parent=0 // pred_region
    _
  $region49: #{market_encoder_forward.1} parent=0 // pred_fallthru
    _
  %v41 = vld [vmem:[%s0] sm:$0xff]
  %v42 = vld [vmem:[%s0 + $0x8] sm:$0xff]
  %v43 = vld [vmem:[%s0 + $0x10] sm:$0xff]
  %v44 = vld [vmem:[%s0 + $0x18] sm:$0xff]
  %v45 = vld [vmem:[%s0 + $0x20] sm:$0xff]
  %v46 = vld [vmem:[%s0 + $0x28] sm:$0xff]
  %v47 = vld [vmem:[%s0 + $0x30] sm:$0xff]
  %v48 = vld [vmem:[%s0 + $0x38] sm:$0xff]
  %v49 = vld [vmem:[%s1] sm:$0xff]
  %v50 = vld [vmem:[%s3] sm:$0x1]
  %v52 = vlaneseq
  %v53 = vshrl.u32 %v52, 7
  %v54 = vsub.s32 0, %v53
  %v55 = vrot.slane %v50, %v54
  %vm57 = vcmask 64512
  %v59 = vsel %vm57, %v41, 0
  %v62 = vsel %vm57, %v42, 0
  %v65 = vsel %vm57, %v43, 0
  %v68 = vsel %vm57, %v44, 0
  %v71 = vsel %vm57, %v45, 0
  %v74 = vsel %vm57, %v46, 0
  %v77 = vsel %vm57, %v47, 0
  %v80 = vsel %vm57, %v48, 0
  %82 = vmatprep.subr.mxu0 0.0
  %83 = vmatpush1.msra.mxu0 0.0
  %84 = vmatprep.subr.mxu0 0.0
  %85 = vmatpush1.msra.mxu0 0.0
  %86 = vmatprep.subr.mxu0 0.0
  %87 = vmatpush1.msra.mxu0 0.0
  %88 = vmatprep.subr.mxu0 0.0
  %89 = vmatpush1.msra.mxu0 0.0
  %90 = vmatprep.subr.mxu0 0.0
  %91 = vmatpush1.msra.mxu0 0.0
  %92 = vmatprep.subr.mxu0 0.0
  %93 = vmatpush1.msra.mxu0 0.0
  %94 = vmatprep.subr.mxu0 0.0
  %95 = vmatpush1.msra.mxu0 0.0
  %96 = vmatprep.subr.mxu0 0.0
  %97 = vmatpush1.msra.mxu0 0.0
  %98 = vmatprep.subr.mxu0 0.0
  %99 = vmatpush1.msra.mxu0 0.0
  %100 = vmatprep.subr.mxu0 0.0
  %101 = vmatpush1.msra.mxu0 0.0
  %102 = vmatprep.subr.mxu0 0.0
  %103 = vmatpush1.msra.mxu0 0.0
  %104 = vmatprep.subr.mxu0 0.0
  %105 = vmatpush1.msra.mxu0 0.0
  %106 = vmatprep.subr.mxu0 0.0
  %107 = vmatpush1.msra.mxu0 0.0
  %108 = vmatprep.subr.mxu0 0.0
  %109 = vmatpush1.msra.mxu0 0.0
  %110 = vmatprep.subr.mxu0 0.0
  %111 = vmatpush1.msra.mxu0 0.0
  %112 = vmatprep.subr.mxu0 0.0
  %113 = vmatpush1.msra.mxu0 %v49
  %114 = vmatprep.subr.mxu0 0.0
  %115 = vmatpush2.msra.mxu0 0.0
  %116 = vmatprep.subr.mxu0 0.0
  %117 = vmatpush2.msra.mxu0 0.0
  %118 = vmatprep.subr.mxu0 0.0
  %119 = vmatpush2.msra.mxu0 0.0
  %120 = vmatprep.subr.mxu0 0.0
  %121 = vmatpush2.msra.mxu0 0.0
  %122 = vmatprep.subr.mxu0 0.0
  %123 = vmatpush2.msra.mxu0 0.0
  %124 = vmatprep.subr.mxu0 0.0
  %125 = vmatpush2.msra.mxu0 0.0
  %126 = vmatprep.subr.mxu0 0.0
  %127 = vmatpush2.msra.mxu0 0.0
  %128 = vmatprep.subr.mxu0 0.0
  %129 = vmatpush2.msra.mxu0 0.0
  %130 = vmatprep.subr.mxu0 0.0
  %131 = vmatpush2.msra.mxu0 0.0
  %132 = vmatprep.subr.mxu0 0.0
  %133 = vmatpush2.msra.mxu0 0.0
  %134 = vmatprep.subr.mxu0 0.0
  %135 = vmatpush2.msra.mxu0 0.0
  %136 = vmatprep.subr.mxu0 0.0
  %137 = vmatpush2.msra.mxu0 0.0
  %138 = vmatprep.subr.mxu0 0.0
  %139 = vmatpush2.msra.mxu0 0.0
  %140 = vmatprep.subr.mxu0 0.0
  %141 = vmatpush2.msra.mxu0 0.0
  %142 = vmatprep.subr.mxu0 0.0
  %143 = vmatpush2.msra.mxu0 0.0
  %144 = vmatprep.subr.mxu0 0.0
  %145 = vmatpush2.msra.mxu0 0.0
  %146 = vmatprep.mubr.f32.mxu0 0.0
  %147 = vmatmul.mubr.f32.gmra.mxu0 %v59
  %v148 = vpop.f32.mrf.mxu0
  %v149 = vadd.f32 %v55, %v148
  %v150 = vpop.f32.mrf.mxu0
  %151 = vmatprep.mubr.f32.mxu0 0.0
  %152 = vmatmul.mubr.f32.gmra.mxu0 %v62
  %v153 = vpop.f32.mrf.mxu0
  %v154 = vadd.f32 %v55, %v153
  %v155 = vpop.f32.mrf.mxu0
  %156 = vmatprep.mubr.f32.mxu0 0.0
  %157 = vmatmul.mubr.f32.gmra.mxu0 %v65
  %v158 = vpop.f32.mrf.mxu0
  %v159 = vadd.f32 %v55, %v158
  %v160 = vpop.f32.mrf.mxu0
  %161 = vmatprep.mubr.f32.mxu0 0.0
  %162 = vmatmul.mubr.f32.gmra.mxu0 %v68
  %v163 = vpop.f32.mrf.mxu0
  %v164 = vadd.f32 %v55, %v163
  %v165 = vpop.f32.mrf.mxu0
  %166 = vmatprep.mubr.f32.mxu0 0.0
  %167 = vmatmul.mubr.f32.gmra.mxu0 %v71
  %v168 = vpop.f32.mrf.mxu0
  %v169 = vadd.f32 %v55, %v168
  %v170 = vpop.f32.mrf.mxu0
  %171 = vmatprep.mubr.f32.mxu0 0.0
  %172 = vmatmul.mubr.f32.gmra.mxu0 %v74
  %v173 = vpop.f32.mrf.mxu0
  %v174 = vadd.f32 %v55, %v173
  %v175 = vpop.f32.mrf.mxu0
  %176 = vmatprep.mubr.f32.mxu0 0.0
  %177 = vmatmul.mubr.f32.gmra.mxu0 %v77
  %v178 = vpop.f32.mrf.mxu0
  %v179 = vadd.f32 %v55, %v178
  %v180 = vpop.f32.mrf.mxu0
  %181 = vmatprep.mubr.f32.mxu0 0.0
  %182 = vmatmul.mubr.f32.gmra.mxu0 %v80
  %v183 = vpop.f32.mrf.mxu0
  %v184 = vadd.f32 %v55, %v183
  %v185 = vpop.f32.mrf.mxu0
  %186 = vdwg.mxu0
  %187 = vst [vmem:[#allocation2] sm:$0xff] %v149
  %188 = vst [vmem:[#allocation2 + $0x8] sm:$0xff] %v154
  %189 = vst [vmem:[#allocation2 + $0x10] sm:$0xff] %v159
  %190 = vst [vmem:[#allocation2 + $0x18] sm:$0xff] %v164
  %191 = vst [vmem:[#allocation2 + $0x20] sm:$0xff] %v169
  %192 = vst [vmem:[#allocation2 + $0x28] sm:$0xff] %v174
  %193 = vst [vmem:[#allocation2 + $0x30] sm:$0xff] %v179
  %194 = vst [vmem:[#allocation2 + $0x38] sm:$0xff] %v184
  %v195 = vld [vmem:[%s2] sm:$0xff]
  %v196 = vld [vmem:[%s2 + $0x8] sm:$0xff]
  %v197 = vld [vmem:[%s2 + $0x10] sm:$0xff]
  %v198 = vld [vmem:[%s2 + $0x18] sm:$0xff]
  %v199 = vld [vmem:[%s4] sm:$0x1]
  %v201 = vlaneseq
  %v202 = vshrl.u32 %v201, 7
  %v203 = vsub.s32 0, %v202
  %v204 = vrot.slane %v199, %v203
  %v206 = vld [vmem:[%s5] sm:$0x1]
  %v208 = vlaneseq
  %v209 = vshrl.u32 %v208, 7
  %v210 = vsub.s32 0, %v209
  %v211 = vrot.slane %v206, %v210
  %v213 = vld [vmem:[#allocation2] sm:$0xff]
  %vm214 = vcmask 261120
  %v216 = vsel %vm214, 0.0, 0
  %218 = vmatprep.subr.mxu0 0.0
  %219 = vmatpush1.msra.mxu0 0.0
  %220 = vmatprep.subr.mxu0 0.0
  %221 = vmatpush1.msra.mxu0 0.0
  %222 = vmatprep.subr.mxu0 0.0
  %223 = vmatpush1.msra.mxu0 0.0
  %224 = vmatprep.subr.mxu0 0.0
  %225 = vmatpush1.msra.mxu0 0.0
  %226 = vmatprep.subr.mxu0 0.0
  %227 = vmatpush1.msra.mxu0 0.0
  %228 = vmatprep.subr.mxu0 0.0
  %229 = vmatpush1.msra.mxu0 0.0
  %230 = vmatprep.subr.mxu0 0.0
  %231 = vmatpush1.msra.mxu0 0.0
  %232 = vmatprep.subr.mxu0 0.0
  %233 = vmatpush1.msra.mxu0 0.0
  %234 = vmatprep.subr.mxu0 0.0
  %235 = vmatpush1.msra.mxu0 0.0
  %236 = vmatprep.subr.mxu0 0.0
  %237 = vmatpush1.msra.mxu0 0.0
  %238 = vmatprep.subr.mxu0 0.0
  %239 = vmatpush1.msra.mxu0 0.0
  %240 = vmatprep.subr.mxu0 0.0
  %241 = vmatpush1.msra.mxu0 0.0
  %242 = vmatprep.subr.mxu0 0.0
  %243 = vmatpush1.msra.mxu0 %v198
  %244 = vmatprep.subr.mxu0 0.0
  %245 = vmatpush1.msra.mxu0 %v197
  %246 = vmatprep.subr.mxu0 0.0
  %247 = vmatpush1.msra.mxu0 %v196
  %248 = vmatprep.subr.mxu0 0.0
  %249 = vmatpush1.msra.mxu0 %v195
  %250 = vmatprep.subr.mxu0 0.0
  %251 = vmatpush2.msra.mxu0 0.0
  %252 = vmatprep.subr.mxu0 0.0
  %253 = vmatpush2.msra.mxu0 0.0
  %254 = vmatprep.subr.mxu0 0.0
  %255 = vmatpush2.msra.mxu0 0.0
  %256 = vmatprep.subr.mxu0 0.0
  %257 = vmatpush2.msra.mxu0 0.0
  %258 = vmatprep.subr.mxu0 0.0
  %259 = vmatpush2.msra.mxu0 0.0
  %260 = vmatprep.subr.mxu0 0.0
  %261 = vmatpush2.msra.mxu0 0.0
  %262 = vmatprep.subr.mxu0 0.0
  %263 = vmatpush2.msra.mxu0 0.0
  %264 = vmatprep.subr.mxu0 0.0
  %265 = vmatpush2.msra.mxu0 0.0
  %266 = vmatprep.subr.mxu0 0.0
  %267 = vmatpush2.msra.mxu0 0.0
  %268 = vmatprep.subr.mxu0 0.0
  %269 = vmatpush2.msra.mxu0 0.0
  %270 = vmatprep.subr.mxu0 0.0
  %271 = vmatpush2.msra.mxu0 0.0
  %272 = vmatprep.subr.mxu0 0.0
  %273 = vmatpush2.msra.mxu0 0.0
  %274 = vmatprep.subr.mxu0 0.0
  %275 = vmatpush2.msra.mxu0 0.0
  %276 = vmatprep.subr.mxu0 0.0
  %277 = vmatpush2.msra.mxu0 0.0
  %278 = vmatprep.subr.mxu0 0.0
  %279 = vmatpush2.msra.mxu0 0.0
  %280 = vmatprep.subr.mxu0 0.0
  %281 = vmatpush2.msra.mxu0 0.0
  %282 = vmatprep.mubr.f32.mxu0 0.0
  %283 = vmatmul.mubr.f32.gmra.mxu0 %v216
  %v284 = vpop.f32.mrf.mxu0
  %v285 = vadd.f32 0.0, %v284
  %v286 = vpop.f32.mrf.mxu0
  %287 = vdwg.mxu0
  %v288 = vadd.f32 %v213, %v285
  %v289 = vtanh.pop %v288
  %v290 = vmul.f32 %v289, %v204
  %v291 = vadd.f32 %v290, %v211
  %v292 = vmul.f32 %v291, 0.0
  %294 = vrot.lane.b32.xlu0 %v291, 64
  %v295 = vpop.permute.xlu0 %294
  %v297 = vmul.f32 %v291, %v295
  %299 = vrot.lane.b32.xlu0 %v297, 32
  %v300 = vpop.permute.xlu0 %299
  %v302 = vadd.f32 %v292, %v300
  %v303 = vtanh.pop %v302
  %305 = vrot.lane.b32.xlu0 %v303, 64
  %v306 = vpop.permute.xlu0 %305
  %v308 = vmul.f32 %v291, %v306
  %v309 = vld [vmem:[#allocation2 + $0x8] sm:$0xff]
  %311 = vrot.lane.b32.xlu0 %v308, 32
  %v312 = vpop.permute.xlu0 %311
  %v313 = vsel %vm214, %v312, 0
  %315 = vmatprep.subr.mxu0 0.0
  %316 = vmatpush1.msra.mxu0 0.0
  %317 = vmatprep.subr.mxu0 0.0
  %318 = vmatpush1.msra.mxu0 0.0
  %319 = vmatprep.subr.mxu0 0.0
  %320 = vmatpush1.msra.mxu0 0.0
  %321 = vmatprep.subr.mxu0 0.0
  %322 = vmatpush1.msra.mxu0 0.0
  %323 = vmatprep.subr.mxu0 0.0
  %324 = vmatpush1.msra.mxu0 0.0
  %325 = vmatprep.subr.mxu0 0.0
  %326 = vmatpush1.msra.mxu0 0.0
  %327 = vmatprep.subr.mxu0 0.0
  %328 = vmatpush1.msra.mxu0 0.0
  %329 = vmatprep.subr.mxu0 0.0
  %330 = vmatpush1.msra.mxu0 0.0
  %331 = vmatprep.subr.mxu0 0.0
  %332 = vmatpush1.msra.mxu0 0.0
  %333 = vmatprep.subr.mxu0 0.0
  %334 = vmatpush1.msra.mxu0 0.0
  %335 = vmatprep.subr.mxu0 0.0
  %336 = vmatpush1.msra.mxu0 0.0
  %337 = vmatprep.subr.mxu0 0.0
  %338 = vmatpush1.msra.mxu0 0.0
  %339 = vmatprep.subr.mxu0 0.0
  %340 = vmatpush1.msra.mxu0 %v198
  %341 = vmatprep.subr.mxu0 0.0
  %342 = vmatpush1.msra.mxu0 %v197
  %343 = vmatprep.subr.mxu0 0.0
  %344 = vmatpush1.msra.mxu0 %v196
  %345 = vmatprep.subr.mxu0 0.0
  %346 = vmatpush1.msra.mxu0 %v195
  %347 = vmatprep.subr.mxu0 0.0
  %348 = vmatpush2.msra.mxu0 0.0
  %349 = vmatprep.subr.mxu0 0.0
  %350 = vmatpush2.msra.mxu0 0.0
  %351 = vmatprep.subr.mxu0 0.0
  %352 = vmatpush2.msra.mxu0 0.0
  %353 = vmatprep.subr.mxu0 0.0
  %354 = vmatpush2.msra.mxu0 0.0
  %355 = vmatprep.subr.mxu0 0.0
  %356 = vmatpush2.msra.mxu0 0.0
  %357 = vmatprep.subr.mxu0 0.0
  %358 = vmatpush2.msra.mxu0 0.0
  %359 = vmatprep.subr.mxu0 0.0
  %360 = vmatpush2.msra.mxu0 0.0
  %361 = vmatprep.subr.mxu0 0.0
  %362 = vmatpush2.msra.mxu0 0.0
  %363 = vmatprep.subr.mxu0 0.0
  %364 = vmatpush2.msra.mxu0 0.0
  %365 = vmatprep.subr.mxu0 0.0
  %366 = vmatpush2.msra.mxu0 0.0
  %367 = vmatprep.subr.mxu0 0.0
  %368 = vmatpush2.msra.mxu0 0.0
  %369 = vmatprep.subr.mxu0 0.0
  %370 = vmatpush2.msra.mxu0 0.0
  %371 = vmatprep.subr.mxu0 0.0
  %372 = vmatpush2.msra.mxu0 0.0
  %373 = vmatprep.subr.mxu0 0.0
  %374 = vmatpush2.msra.mxu0 0.0
  %375 = vmatprep.subr.mxu0 0.0
  %376 = vmatpush2.msra.mxu0 0.0
  %377 = vmatprep.subr.mxu0 0.0
  %378 = vmatpush2.msra.mxu0 0.0
  %379 = vmatprep.mubr.f32.mxu0 0.0
  %380 = vmatmul.mubr.f32.gmra.mxu0 %v313
  %v381 = vpop.f32.mrf.mxu0
  %v382 = vadd.f32 0.0, %v381
  %v383 = vpop.f32.mrf.mxu0
  %384 = vdwg.mxu0
  %v385 = vadd.f32 %v309, %v382
  %v386 = vtanh.pop %v385
  %v387 = vmul.f32 %v386, %v204
  %v388 = vadd.f32 %v387, %v211
  %v389 = vmul.f32 %v388, %v302
  %391 = vrot.lane.b32.xlu0 %v388, 64
  %v392 = vpop.permute.xlu0 %391
  %v394 = vmul.f32 %v388, %v392
  %396 = vrot.lane.b32.xlu0 %v394, 32
  %v397 = vpop.permute.xlu0 %396
  %v399 = vadd.f32 %v389, %v397
  %v400 = vtanh.pop %v399
  %402 = vrot.lane.b32.xlu0 %v400, 64
  %v403 = vpop.permute.xlu0 %402
  %v405 = vmul.f32 %v388, %v403
  %v406 = vld [vmem:[#allocation2 + $0x10] sm:$0xff]
  %408 = vrot.lane.b32.xlu0 %v405, 32
  %v409 = vpop.permute.xlu0 %408
  %v410 = vsel %vm214, %v409, 0
  %412 = vmatprep.subr.mxu0 0.0
  %413 = vmatpush1.msra.mxu0 0.0
  %414 = vmatprep.subr.mxu0 0.0
  %415 = vmatpush1.msra.mxu0 0.0
  %416 = vmatprep.subr.mxu0 0.0
  %417 = vmatpush1.msra.mxu0 0.0
  %418 = vmatprep.subr.mxu0 0.0
  %419 = vmatpush1.msra.mxu0 0.0
  %420 = vmatprep.subr.mxu0 0.0
  %421 = vmatpush1.msra.mxu0 0.0
  %422 = vmatprep.subr.mxu0 0.0
  %423 = vmatpush1.msra.mxu0 0.0
  %424 = vmatprep.subr.mxu0 0.0
  %425 = vmatpush1.msra.mxu0 0.0
  %426 = vmatprep.subr.mxu0 0.0
  %427 = vmatpush1.msra.mxu0 0.0
  %428 = vmatprep.subr.mxu0 0.0
  %429 = vmatpush1.msra.mxu0 0.0
  %430 = vmatprep.subr.mxu0 0.0
  %431 = vmatpush1.msra.mxu0 0.0
  %432 = vmatprep.subr.mxu0 0.0
  %433 = vmatpush1.msra.mxu0 0.0
  %434 = vmatprep.subr.mxu0 0.0
  %435 = vmatpush1.msra.mxu0 0.0
  %436 = vmatprep.subr.mxu0 0.0
  %437 = vmatpush1.msra.mxu0 %v198
  %438 = vmatprep.subr.mxu0 0.0
  %439 = vmatpush1.msra.mxu0 %v197
  %440 = vmatprep.subr.mxu0 0.0
  %441 = vmatpush1.msra.mxu0 %v196
  %442 = vmatprep.subr.mxu0 0.0
  %443 = vmatpush1.msra.mxu0 %v195
  %444 = vmatprep.subr.mxu0 0.0
  %445 = vmatpush2.msra.mxu0 0.0
  %446 = vmatprep.subr.mxu0 0.0
  %447 = vmatpush2.msra.mxu0 0.0
  %448 = vmatprep.subr.mxu0 0.0
  %449 = vmatpush2.msra.mxu0 0.0
  %450 = vmatprep.subr.mxu0 0.0
  %451 = vmatpush2.msra.mxu0 0.0
  %452 = vmatprep.subr.mxu0 0.0
  %453 = vmatpush2.msra.mxu0 0.0
  %454 = vmatprep.subr.mxu0 0.0
  %455 = vmatpush2.msra.mxu0 0.0
  %456 = vmatprep.subr.mxu0 0.0
  %457 = vmatpush2.msra.mxu0 0.0
  %458 = vmatprep.subr.mxu0 0.0
  %459 = vmatpush2.msra.mxu0 0.0
  %460 = vmatprep.subr.mxu0 0.0
  %461 = vmatpush2.msra.mxu0 0.0
  %462 = vmatprep.subr.mxu0 0.0
  %463 = vmatpush2.msra.mxu0 0.0
  %464 = vmatprep.subr.mxu0 0.0
  %465 = vmatpush2.msra.mxu0 0.0
  %466 = vmatprep.subr.mxu0 0.0
  %467 = vmatpush2.msra.mxu0 0.0
  %468 = vmatprep.subr.mxu0 0.0
  %469 = vmatpush2.msra.mxu0 0.0
  %470 = vmatprep.subr.mxu0 0.0
  %471 = vmatpush2.msra.mxu0 0.0
  %472 = vmatprep.subr.mxu0 0.0
  %473 = vmatpush2.msra.mxu0 0.0
  %474 = vmatprep.subr.mxu0 0.0
  %475 = vmatpush2.msra.mxu0 0.0
  %476 = vmatprep.mubr.f32.mxu0 0.0
  %477 = vmatmul.mubr.f32.gmra.mxu0 %v410
  %v478 = vpop.f32.mrf.mxu0
  %v479 = vadd.f32 0.0, %v478
  %v480 = vpop.f32.mrf.mxu0
  %481 = vdwg.mxu0
  %v482 = vadd.f32 %v406, %v479
  %v483 = vtanh.pop %v482
  %v484 = vmul.f32 %v483, %v204
  %v485 = vadd.f32 %v484, %v211
  %v486 = vmul.f32 %v485, %v399
  %488 = vrot.lane.b32.xlu0 %v485, 64
  %v489 = vpop.permute.xlu0 %488
  %v491 = vmul.f32 %v485, %v489
  %493 = vrot.lane.b32.xlu0 %v491, 32
  %v494 = vpop.permute.xlu0 %493
  %v496 = vadd.f32 %v486, %v494
  %v497 = vtanh.pop %v496
  %499 = vrot.lane.b32.xlu0 %v497, 64
  %v500 = vpop.permute.xlu0 %499
  %v502 = vmul.f32 %v485, %v500
  %v503 = vld [vmem:[#allocation2 + $0x18] sm:$0xff]
  %505 = vrot.lane.b32.xlu0 %v502, 32
  %v506 = vpop.permute.xlu0 %505
  %v507 = vsel %vm214, %v506, 0
  %509 = vmatprep.subr.mxu0 0.0
  %510 = vmatpush1.msra.mxu0 0.0
  %511 = vmatprep.subr.mxu0 0.0
  %512 = vmatpush1.msra.mxu0 0.0
  %513 = vmatprep.subr.mxu0 0.0
  %514 = vmatpush1.msra.mxu0 0.0
  %515 = vmatprep.subr.mxu0 0.0
  %516 = vmatpush1.msra.mxu0 0.0
  %517 = vmatprep.subr.mxu0 0.0
  %518 = vmatpush1.msra.mxu0 0.0
  %519 = vmatprep.subr.mxu0 0.0
  %520 = vmatpush1.msra.mxu0 0.0
  %521 = vmatprep.subr.mxu0 0.0
  %522 = vmatpush1.msra.mxu0 0.0
  %523 = vmatprep.subr.mxu0 0.0
  %524 = vmatpush1.msra.mxu0 0.0
  %525 = vmatprep.subr.mxu0 0.0
  %526 = vmatpush1.msra.mxu0 0.0
  %527 = vmatprep.subr.mxu0 0.0
  %528 = vmatpush1.msra.mxu0 0.0
  %529 = vmatprep.subr.mxu0 0.0
  %530 = vmatpush1.msra.mxu0 0.0
  %531 = vmatprep.subr.mxu0 0.0
  %532 = vmatpush1.msra.mxu0 0.0
  %533 = vmatprep.subr.mxu0 0.0
  %534 = vmatpush1.msra.mxu0 %v198
  %535 = vmatprep.subr.mxu0 0.0
  %536 = vmatpush1.msra.mxu0 %v197
  %537 = vmatprep.subr.mxu0 0.0
  %538 = vmatpush1.msra.mxu0 %v196
  %539 = vmatprep.subr.mxu0 0.0
  %540 = vmatpush1.msra.mxu0 %v195
  %541 = vmatprep.subr.mxu0 0.0
  %542 = vmatpush2.msra.mxu0 0.0
  %543 = vmatprep.subr.mxu0 0.0
  %544 = vmatpush2.msra.mxu0 0.0
  %545 = vmatprep.subr.mxu0 0.0
  %546 = vmatpush2.msra.mxu0 0.0
  %547 = vmatprep.subr.mxu0 0.0
  %548 = vmatpush2.msra.mxu0 0.0
  %549 = vmatprep.subr.mxu0 0.0
  %550 = vmatpush2.msra.mxu0 0.0
  %551 = vmatprep.subr.mxu0 0.0
  %552 = vmatpush2.msra.mxu0 0.0
  %553 = vmatprep.subr.mxu0 0.0
  %554 = vmatpush2.msra.mxu0 0.0
  %555 = vmatprep.subr.mxu0 0.0
  %556 = vmatpush2.msra.mxu0 0.0
  %557 = vmatprep.subr.mxu0 0.0
  %558 = vmatpush2.msra.mxu0 0.0
  %559 = vmatprep.subr.mxu0 0.0
  %560 = vmatpush2.msra.mxu0 0.0
  %561 = vmatprep.subr.mxu0 0.0
  %562 = vmatpush2.msra.mxu0 0.0
  %563 = vmatprep.subr.mxu0 0.0
  %564 = vmatpush2.msra.mxu0 0.0
  %565 = vmatprep.subr.mxu0 0.0
  %566 = vmatpush2.msra.mxu0 0.0
  %567 = vmatprep.subr.mxu0 0.0
  %568 = vmatpush2.msra.mxu0 0.0
  %569 = vmatprep.subr.mxu0 0.0
  %570 = vmatpush2.msra.mxu0 0.0
  %571 = vmatprep.subr.mxu0 0.0
  %572 = vmatpush2.msra.mxu0 0.0
  %573 = vmatprep.mubr.f32.mxu0 0.0
  %574 = vmatmul.mubr.f32.gmra.mxu0 %v507
  %v575 = vpop.f32.mrf.mxu0
  %v576 = vadd.f32 0.0, %v575
  %v577 = vpop.f32.mrf.mxu0
  %578 = vdwg.mxu0
  %v579 = vadd.f32 %v503, %v576
  %v580 = vtanh.pop %v579
  %v581 = vmul.f32 %v580, %v204
  %v582 = vadd.f32 %v581, %v211
  %v583 = vmul.f32 %v582, %v496
  %585 = vrot.lane.b32.xlu0 %v582, 64
  %v586 = vpop.permute.xlu0 %585
  %v588 = vmul.f32 %v582, %v586
  %590 = vrot.lane.b32.xlu0 %v588, 32
  %v591 = vpop.permute.xlu0 %590
  %v593 = vadd.f32 %v583, %v591
  %v594 = vtanh.pop %v593
  %596 = vrot.lane.b32.xlu0 %v594, 64
  %v597 = vpop.permute.xlu0 %596
  %v599 = vmul.f32 %v582, %v597
  %v600 = vld [vmem:[#allocation2 + $0x20] sm:$0xff]
  %602 = vrot.lane.b32.xlu0 %v599, 32
  %v603 = vpop.permute.xlu0 %602
  %v604 = vsel %vm214, %v603, 0
  %606 = vmatprep.subr.mxu0 0.0
  %607 = vmatpush1.msra.mxu0 0.0
  %608 = vmatprep.subr.mxu0 0.0
  %609 = vmatpush1.msra.mxu0 0.0
  %610 = vmatprep.subr.mxu0 0.0
  %611 = vmatpush1.msra.mxu0 0.0
  %612 = vmatprep.subr.mxu0 0.0
  %613 = vmatpush1.msra.mxu0 0.0
  %614 = vmatprep.subr.mxu0 0.0
  %615 = vmatpush1.msra.mxu0 0.0
  %616 = vmatprep.subr.mxu0 0.0
  %617 = vmatpush1.msra.mxu0 0.0
  %618 = vmatprep.subr.mxu0 0.0
  %619 = vmatpush1.msra.mxu0 0.0
  %620 = vmatprep.subr.mxu0 0.0
  %621 = vmatpush1.msra.mxu0 0.0
  %622 = vmatprep.subr.mxu0 0.0
  %623 = vmatpush1.msra.mxu0 0.0
  %624 = vmatprep.subr.mxu0 0.0
  %625 = vmatpush1.msra.mxu0 0.0
  %626 = vmatprep.subr.mxu0 0.0
  %627 = vmatpush1.msra.mxu0 0.0
  %628 = vmatprep.subr.mxu0 0.0
  %629 = vmatpush1.msra.mxu0 0.0
  %630 = vmatprep.subr.mxu0 0.0
  %631 = vmatpush1.msra.mxu0 %v198
  %632 = vmatprep.subr.mxu0 0.0
  %633 = vmatpush1.msra.mxu0 %v197
  %634 = vmatprep.subr.mxu0 0.0
  %635 = vmatpush1.msra.mxu0 %v196
  %636 = vmatprep.subr.mxu0 0.0
  %637 = vmatpush1.msra.mxu0 %v195
  %638 = vmatprep.subr.mxu0 0.0
  %639 = vmatpush2.msra.mxu0 0.0
  %640 = vmatprep.subr.mxu0 0.0
  %641 = vmatpush2.msra.mxu0 0.0
  %642 = vmatprep.subr.mxu0 0.0
  %643 = vmatpush2.msra.mxu0 0.0
  %644 = vmatprep.subr.mxu0 0.0
  %645 = vmatpush2.msra.mxu0 0.0
  %646 = vmatprep.subr.mxu0 0.0
  %647 = vmatpush2.msra.mxu0 0.0
  %648 = vmatprep.subr.mxu0 0.0
  %649 = vmatpush2.msra.mxu0 0.0
  %650 = vmatprep.subr.mxu0 0.0
  %651 = vmatpush2.msra.mxu0 0.0
  %652 = vmatprep.subr.mxu0 0.0
  %653 = vmatpush2.msra.mxu0 0.0
  %654 = vmatprep.subr.mxu0 0.0
  %655 = vmatpush2.msra.mxu0 0.0
  %656 = vmatprep.subr.mxu0 0.0
  %657 = vmatpush2.msra.mxu0 0.0
  %658 = vmatprep.subr.mxu0 0.0
  %659 = vmatpush2.msra.mxu0 0.0
  %660 = vmatprep.subr.mxu0 0.0
  %661 = vmatpush2.msra.mxu0 0.0
  %662 = vmatprep.subr.mxu0 0.0
  %663 = vmatpush2.msra.mxu0 0.0
  %664 = vmatprep.subr.mxu0 0.0
  %665 = vmatpush2.msra.mxu0 0.0
  %666 = vmatprep.subr.mxu0 0.0
  %667 = vmatpush2.msra.mxu0 0.0
  %668 = vmatprep.subr.mxu0 0.0
  %669 = vmatpush2.msra.mxu0 0.0
  %670 = vmatprep.mubr.f32.mxu0 0.0
  %671 = vmatmul.mubr.f32.gmra.mxu0 %v604
  %v672 = vpop.f32.mrf.mxu0
  %v673 = vadd.f32 0.0, %v672
  %v674 = vpop.f32.mrf.mxu0
  %675 = vdwg.mxu0
  %v676 = vadd.f32 %v600, %v673
  %v677 = vtanh.pop %v676
  %v678 = vmul.f32 %v677, %v204
  %v679 = vadd.f32 %v678, %v211
  %v680 = vmul.f32 %v679, %v593
  %682 = vrot.lane.b32.xlu0 %v679, 64
  %v683 = vpop.permute.xlu0 %682
  %v685 = vmul.f32 %v679, %v683
  %687 = vrot.lane.b32.xlu0 %v685, 32
  %v688 = vpop.permute.xlu0 %687
  %v690 = vadd.f32 %v680, %v688
  %v691 = vtanh.pop %v690
  %693 = vrot.lane.b32.xlu0 %v691, 64
  %v694 = vpop.permute.xlu0 %693
  %v696 = vmul.f32 %v679, %v694
  %v697 = vld [vmem:[#allocation2 + $0x28] sm:$0xff]
  %699 = vrot.lane.b32.xlu0 %v696, 32
  %v700 = vpop.permute.xlu0 %699
  %v701 = vsel %vm214, %v700, 0
  %703 = vmatprep.subr.mxu0 0.0
  %704 = vmatpush1.msra.mxu0 0.0
  %705 = vmatprep.subr.mxu0 0.0
  %706 = vmatpush1.msra.mxu0 0.0
  %707 = vmatprep.subr.mxu0 0.0
  %708 = vmatpush1.msra.mxu0 0.0
  %709 = vmatprep.subr.mxu0 0.0
  %710 = vmatpush1.msra.mxu0 0.0
  %711 = vmatprep.subr.mxu0 0.0
  %712 = vmatpush1.msra.mxu0 0.0
  %713 = vmatprep.subr.mxu0 0.0
  %714 = vmatpush1.msra.mxu0 0.0
  %715 = vmatprep.subr.mxu0 0.0
  %716 = vmatpush1.msra.mxu0 0.0
  %717 = vmatprep.subr.mxu0 0.0
  %718 = vmatpush1.msra.mxu0 0.0
  %719 = vmatprep.subr.mxu0 0.0
  %720 = vmatpush1.msra.mxu0 0.0
  %721 = vmatprep.subr.mxu0 0.0
  %722 = vmatpush1.msra.mxu0 0.0
  %723 = vmatprep.subr.mxu0 0.0
  %724 = vmatpush1.msra.mxu0 0.0
  %725 = vmatprep.subr.mxu0 0.0
  %726 = vmatpush1.msra.mxu0 0.0
  %727 = vmatprep.subr.mxu0 0.0
  %728 = vmatpush1.msra.mxu0 %v198
  %729 = vmatprep.subr.mxu0 0.0
  %730 = vmatpush1.msra.mxu0 %v197
  %731 = vmatprep.subr.mxu0 0.0
  %732 = vmatpush1.msra.mxu0 %v196
  %733 = vmatprep.subr.mxu0 0.0
  %734 = vmatpush1.msra.mxu0 %v195
  %735 = vmatprep.subr.mxu0 0.0
  %736 = vmatpush2.msra.mxu0 0.0
  %737 = vmatprep.subr.mxu0 0.0
  %738 = vmatpush2.msra.mxu0 0.0
  %739 = vmatprep.subr.mxu0 0.0
  %740 = vmatpush2.msra.mxu0 0.0
  %741 = vmatprep.subr.mxu0 0.0
  %742 = vmatpush2.msra.mxu0 0.0
  %743 = vmatprep.subr.mxu0 0.0
  %744 = vmatpush2.msra.mxu0 0.0
  %745 = vmatprep.subr.mxu0 0.0
  %746 = vmatpush2.msra.mxu0 0.0
  %747 = vmatprep.subr.mxu0 0.0
  %748 = vmatpush2.msra.mxu0 0.0
  %749 = vmatprep.subr.mxu0 0.0
  %750 = vmatpush2.msra.mxu0 0.0
  %751 = vmatprep.subr.mxu0 0.0
  %752 = vmatpush2.msra.mxu0 0.0
  %753 = vmatprep.subr.mxu0 0.0
  %754 = vmatpush2.msra.mxu0 0.0
  %755 = vmatprep.subr.mxu0 0.0
  %756 = vmatpush2.msra.mxu0 0.0
  %757 = vmatprep.subr.mxu0 0.0
  %758 = vmatpush2.msra.mxu0 0.0
  %759 = vmatprep.subr.mxu0 0.0
  %760 = vmatpush2.msra.mxu0 0.0
  %761 = vmatprep.subr.mxu0 0.0
  %762 = vmatpush2.msra.mxu0 0.0
  %763 = vmatprep.subr.mxu0 0.0
  %764 = vmatpush2.msra.mxu0 0.0
  %765 = vmatprep.subr.mxu0 0.0
  %766 = vmatpush2.msra.mxu0 0.0
  %767 = vmatprep.mubr.f32.mxu0 0.0
  %768 = vmatmul.mubr.f32.gmra.mxu0 %v701
  %v769 = vpop.f32.mrf.mxu0
  %v770 = vadd.f32 0.0, %v769
  %v771 = vpop.f32.mrf.mxu0
  %772 = vdwg.mxu0
  %v773 = vadd.f32 %v697, %v770
  %v774 = vtanh.pop %v773
  %v775 = vmul.f32 %v774, %v204
  %v776 = vadd.f32 %v775, %v211
  %v777 = vmul.f32 %v776, %v690
  %779 = vrot.lane.b32.xlu0 %v776, 64
  %v780 = vpop.permute.xlu0 %779
  %v782 = vmul.f32 %v776, %v780
  %784 = vrot.lane.b32.xlu0 %v782, 32
  %v785 = vpop.permute.xlu0 %784
  %v787 = vadd.f32 %v777, %v785
  %v788 = vtanh.pop %v787
  %790 = vrot.lane.b32.xlu0 %v788, 64
  %v791 = vpop.permute.xlu0 %790
  %v793 = vmul.f32 %v776, %v791
  %v794 = vld [vmem:[#allocation2 + $0x30] sm:$0xff]
  %796 = vrot.lane.b32.xlu0 %v793, 32
  %v797 = vpop.permute.xlu0 %796
  %v798 = vsel %vm214, %v797, 0
  %800 = vmatprep.subr.mxu0 0.0
  %801 = vmatpush1.msra.mxu0 0.0
  %802 = vmatprep.subr.mxu0 0.0
  %803 = vmatpush1.msra.mxu0 0.0
  %804 = vmatprep.subr.mxu0 0.0
  %805 = vmatpush1.msra.mxu0 0.0
  %806 = vmatprep.subr.mxu0 0.0
  %807 = vmatpush1.msra.mxu0 0.0
  %808 = vmatprep.subr.mxu0 0.0
  %809 = vmatpush1.msra.mxu0 0.0
  %810 = vmatprep.subr.mxu0 0.0
  %811 = vmatpush1.msra.mxu0 0.0
  %812 = vmatprep.subr.mxu0 0.0
  %813 = vmatpush1.msra.mxu0 0.0
  %814 = vmatprep.subr.mxu0 0.0
  %815 = vmatpush1.msra.mxu0 0.0
  %816 = vmatprep.subr.mxu0 0.0
  %817 = vmatpush1.msra.mxu0 0.0
  %818 = vmatprep.subr.mxu0 0.0
  %819 = vmatpush1.msra.mxu0 0.0
  %820 = vmatprep.subr.mxu0 0.0
  %821 = vmatpush1.msra.mxu0 0.0
  %822 = vmatprep.subr.mxu0 0.0
  %823 = vmatpush1.msra.mxu0 0.0
  %824 = vmatprep.subr.mxu0 0.0
  %825 = vmatpush1.msra.mxu0 %v198
  %826 = vmatprep.subr.mxu0 0.0
  %827 = vmatpush1.msra.mxu0 %v197
  %828 = vmatprep.subr.mxu0 0.0
  %829 = vmatpush1.msra.mxu0 %v196
  %830 = vmatprep.subr.mxu0 0.0
  %831 = vmatpush1.msra.mxu0 %v195
  %832 = vmatprep.subr.mxu0 0.0
  %833 = vmatpush2.msra.mxu0 0.0
  %834 = vmatprep.subr.mxu0 0.0
  %835 = vmatpush2.msra.mxu0 0.0
  %836 = vmatprep.subr.mxu0 0.0
  %837 = vmatpush2.msra.mxu0 0.0
  %838 = vmatprep.subr.mxu0 0.0
  %839 = vmatpush2.msra.mxu0 0.0
  %840 = vmatprep.subr.mxu0 0.0
  %841 = vmatpush2.msra.mxu0 0.0
  %842 = vmatprep.subr.mxu0 0.0
  %843 = vmatpush2.msra.mxu0 0.0
  %844 = vmatprep.subr.mxu0 0.0
  %845 = vmatpush2.msra.mxu0 0.0
  %846 = vmatprep.subr.mxu0 0.0
  %847 = vmatpush2.msra.mxu0 0.0
  %848 = vmatprep.subr.mxu0 0.0
  %849 = vmatpush2.msra.mxu0 0.0
  %850 = vmatprep.subr.mxu0 0.0
  %851 = vmatpush2.msra.mxu0 0.0
  %852 = vmatprep.subr.mxu0 0.0
  %853 = vmatpush2.msra.mxu0 0.0
  %854 = vmatprep.subr.mxu0 0.0
  %855 = vmatpush2.msra.mxu0 0.0
  %856 = vmatprep.subr.mxu0 0.0
  %857 = vmatpush2.msra.mxu0 0.0
  %858 = vmatprep.subr.mxu0 0.0
  %859 = vmatpush2.msra.mxu0 0.0
  %860 = vmatprep.subr.mxu0 0.0
  %861 = vmatpush2.msra.mxu0 0.0
  %862 = vmatprep.subr.mxu0 0.0
  %863 = vmatpush2.msra.mxu0 0.0
  %864 = vmatprep.mubr.f32.mxu0 0.0
  %865 = vmatmul.mubr.f32.gmra.mxu0 %v798
  %v866 = vpop.f32.mrf.mxu0
  %v867 = vadd.f32 0.0, %v866
  %v868 = vpop.f32.mrf.mxu0
  %869 = vdwg.mxu0
  %v870 = vadd.f32 %v794, %v867
  %v871 = vtanh.pop %v870
  %v872 = vmul.f32 %v871, %v204
  %v873 = vadd.f32 %v872, %v211
  %v874 = vmul.f32 %v873, %v787
  %876 = vrot.lane.b32.xlu0 %v873, 64
  %v877 = vpop.permute.xlu0 %876
  %v879 = vmul.f32 %v873, %v877
  %881 = vrot.lane.b32.xlu0 %v879, 32
  %v882 = vpop.permute.xlu0 %881
  %v884 = vadd.f32 %v874, %v882
  %v885 = vtanh.pop %v884
  %887 = vrot.lane.b32.xlu0 %v885, 64
  %v888 = vpop.permute.xlu0 %887
  %v890 = vmul.f32 %v873, %v888
  %v891 = vld [vmem:[#allocation2 + $0x38] sm:$0xff]
  %893 = vrot.lane.b32.xlu0 %v890, 32
  %v894 = vpop.permute.xlu0 %893
  %v895 = vsel %vm214, %v894, 0
  %897 = vmatprep.subr.mxu0 0.0
  %898 = vmatpush1.msra.mxu0 0.0
  %899 = vmatprep.subr.mxu0 0.0
  %900 = vmatpush1.msra.mxu0 0.0
  %901 = vmatprep.subr.mxu0 0.0
  %902 = vmatpush1.msra.mxu0 0.0
  %903 = vmatprep.subr.mxu0 0.0
  %904 = vmatpush1.msra.mxu0 0.0
  %905 = vmatprep.subr.mxu0 0.0
  %906 = vmatpush1.msra.mxu0 0.0
  %907 = vmatprep.subr.mxu0 0.0
  %908 = vmatpush1.msra.mxu0 0.0
  %909 = vmatprep.subr.mxu0 0.0
  %910 = vmatpush1.msra.mxu0 0.0
  %911 = vmatprep.subr.mxu0 0.0
  %912 = vmatpush1.msra.mxu0 0.0
  %913 = vmatprep.subr.mxu0 0.0
  %914 = vmatpush1.msra.mxu0 0.0
  %915 = vmatprep.subr.mxu0 0.0
  %916 = vmatpush1.msra.mxu0 0.0
  %917 = vmatprep.subr.mxu0 0.0
  %918 = vmatpush1.msra.mxu0 0.0
  %919 = vmatprep.subr.mxu0 0.0
  %920 = vmatpush1.msra.mxu0 0.0
  %921 = vmatprep.subr.mxu0 0.0
  %922 = vmatpush1.msra.mxu0 %v198
  %923 = vmatprep.subr.mxu0 0.0
  %924 = vmatpush1.msra.mxu0 %v197
  %925 = vmatprep.subr.mxu0 0.0
  %926 = vmatpush1.msra.mxu0 %v196
  %927 = vmatprep.subr.mxu0 0.0
  %928 = vmatpush1.msra.mxu0 %v195
  %929 = vmatprep.subr.mxu0 0.0
  %930 = vmatpush2.msra.mxu0 0.0
  %931 = vmatprep.subr.mxu0 0.0
  %932 = vmatpush2.msra.mxu0 0.0
  %933 = vmatprep.subr.mxu0 0.0
  %934 = vmatpush2.msra.mxu0 0.0
  %935 = vmatprep.subr.mxu0 0.0
  %936 = vmatpush2.msra.mxu0 0.0
  %937 = vmatprep.subr.mxu0 0.0
  %938 = vmatpush2.msra.mxu0 0.0
  %939 = vmatprep.subr.mxu0 0.0
  %940 = vmatpush2.msra.mxu0 0.0
  %941 = vmatprep.subr.mxu0 0.0
  %942 = vmatpush2.msra.mxu0 0.0
  %943 = vmatprep.subr.mxu0 0.0
  %944 = vmatpush2.msra.mxu0 0.0
  %945 = vmatprep.subr.mxu0 0.0
  %946 = vmatpush2.msra.mxu0 0.0
  %947 = vmatprep.subr.mxu0 0.0
  %948 = vmatpush2.msra.mxu0 0.0
  %949 = vmatprep.subr.mxu0 0.0
  %950 = vmatpush2.msra.mxu0 0.0
  %951 = vmatprep.subr.mxu0 0.0
  %952 = vmatpush2.msra.mxu0 0.0
  %953 = vmatprep.subr.mxu0 0.0
  %954 = vmatpush2.msra.mxu0 0.0
  %955 = vmatprep.subr.mxu0 0.0
  %956 = vmatpush2.msra.mxu0 0.0
  %957 = vmatprep.subr.mxu0 0.0
  %958 = vmatpush2.msra.mxu0 0.0
  %959 = vmatprep.subr.mxu0 0.0
  %960 = vmatpush2.msra.mxu0 0.0
  %961 = vmatprep.mubr.f32.mxu0 0.0
  %962 = vmatmul.mubr.f32.gmra.mxu0 %v895
  %v963 = vpop.f32.mrf.mxu0
  %v964 = vadd.f32 0.0, %v963
  %v965 = vpop.f32.mrf.mxu0
  %966 = vdwg.mxu0
  %v967 = vadd.f32 %v891, %v964
  %v968 = vtanh.pop %v967
  %v969 = vmul.f32 %v968, %v204
  %v970 = vadd.f32 %v969, %v211
  %v971 = vmul.f32 %v970, %v884
  %973 = vrot.lane.b32.xlu0 %v970, 64
  %v974 = vpop.permute.xlu0 %973
  %v976 = vmul.f32 %v970, %v974
  %978 = vrot.lane.b32.xlu0 %v976, 32
  %v979 = vpop.permute.xlu0 %978
  %v981 = vadd.f32 %v971, %v979
  %v982 = vtanh.pop %v981
  %984 = vrot.lane.b32.xlu0 %v982, 64
  %v985 = vpop.permute.xlu0 %984
  %v987 = vmul.f32 %v970, %v985
  %v988 = vld [vmem:[%s0 + $0x38] sm:$0xff]
  %v989 = vld [vmem:[%s6] sm:$0xff]
  %v990 = vld [vmem:[%s7] sm:$0x1]
  %v992 = vlaneseq
  %v993 = vshrl.u32 %v992, 7
  %v994 = vsub.s32 0, %v993
  %v995 = vrot.slane %v990, %v994
  %v998 = vsel %vm57, %v988, 0
  %1000 = vmatprep.subr.mxu0 0.0
  %1001 = vmatpush1.msra.mxu0 0.0
  %1002 = vmatprep.subr.mxu0 0.0
  %1003 = vmatpush1.msra.mxu0 0.0
  %1004 = vmatprep.subr.mxu0 0.0
  %1005 = vmatpush1.msra.mxu0 0.0
  %1006 = vmatprep.subr.mxu0 0.0
  %1007 = vmatpush1.msra.mxu0 0.0
  %1008 = vmatprep.subr.mxu0 0.0
  %1009 = vmatpush1.msra.mxu0 0.0
  %1010 = vmatprep.subr.mxu0 0.0
  %1011 = vmatpush1.msra.mxu0 0.0
  %1012 = vmatprep.subr.mxu0 0.0
  %1013 = vmatpush1.msra.mxu0 0.0
  %1014 = vmatprep.subr.mxu0 0.0
  %1015 = vmatpush1.msra.mxu0 0.0
  %1016 = vmatprep.subr.mxu0 0.0
  %1017 = vmatpush1.msra.mxu0 0.0
  %1018 = vmatprep.subr.mxu0 0.0
  %1019 = vmatpush1.msra.mxu0 0.0
  %1020 = vmatprep.subr.mxu0 0.0
  %1021 = vmatpush1.msra.mxu0 0.0
  %1022 = vmatprep.subr.mxu0 0.0
  %1023 = vmatpush1.msra.mxu0 0.0
  %1024 = vmatprep.subr.mxu0 0.0
  %1025 = vmatpush1.msra.mxu0 0.0
  %1026 = vmatprep.subr.mxu0 0.0
  %1027 = vmatpush1.msra.mxu0 0.0
  %1028 = vmatprep.subr.mxu0 0.0
  %1029 = vmatpush1.msra.mxu0 0.0
  %1030 = vmatprep.subr.mxu0 0.0
  %1031 = vmatpush1.msra.mxu0 %v989
  %1032 = vmatprep.subr.mxu0 0.0
  %1033 = vmatpush2.msra.mxu0 0.0
  %1034 = vmatprep.subr.mxu0 0.0
  %1035 = vmatpush2.msra.mxu0 0.0
  %1036 = vmatprep.subr.mxu0 0.0
  %1037 = vmatpush2.msra.mxu0 0.0
  %1038 = vmatprep.subr.mxu0 0.0
  %1039 = vmatpush2.msra.mxu0 0.0
  %1040 = vmatprep.subr.mxu0 0.0
  %1041 = vmatpush2.msra.mxu0 0.0
  %1042 = vmatprep.subr.mxu0 0.0
  %1043 = vmatpush2.msra.mxu0 0.0
  %1044 = vmatprep.subr.mxu0 0.0
  %1045 = vmatpush2.msra.mxu0 0.0
  %1046 = vmatprep.subr.mxu0 0.0
  %1047 = vmatpush2.msra.mxu0 0.0
  %1048 = vmatprep.subr.mxu0 0.0
  %1049 = vmatpush2.msra.mxu0 0.0
  %1050 = vmatprep.subr.mxu0 0.0
  %1051 = vmatpush2.msra.mxu0 0.0
  %1052 = vmatprep.subr.mxu0 0.0
  %1053 = vmatpush2.msra.mxu0 0.0
  %1054 = vmatprep.subr.mxu0 0.0
  %1055 = vmatpush2.msra.mxu0 0.0
  %1056 = vmatprep.subr.mxu0 0.0
  %1057 = vmatpush2.msra.mxu0 0.0
  %1058 = vmatprep.subr.mxu0 0.0
  %1059 = vmatpush2.msra.mxu0 0.0
  %1060 = vmatprep.subr.mxu0 0.0
  %1061 = vmatpush2.msra.mxu0 0.0
  %1062 = vmatprep.subr.mxu0 0.0
  %1063 = vmatpush2.msra.mxu0 0.0
  %1064 = vmatprep.mubr.f32.mxu0 0.0
  %1065 = vmatmul.mubr.f32.gmra.mxu0 %v998
  %v1066 = vpop.f32.mrf.mxu0
  %v1067 = vadd.f32 %v995, %v1066
  %v1068 = vpop.f32.mrf.mxu0
  %1069 = vdwg.mxu0
  %v1070 = vxor.u32 %v1067, 2147483648
  %v1071 = vmul.f32 %v1070, 1.442695
  %v1072 = vpow.pop %v1071
  %v1073 = vadd.f32 %v1072, 1.0
  %v1074 = vrcp.pop %v1073
  %v1075 = vmul.f32 1.0, %v1074
  %v1076 = vtanh.pop %v1067
  %1078 = vrot.lane.b32.xlu0 %v1076, 96
  %v1079 = vpop.permute.xlu0 %1078
  %v1081 = vmul.f32 %v1075, %v1079
  %v1082 = vtanh.pop %v1081
  %1084 = vrot.lane.b32.xlu0 %v1082, 64
  %v1085 = vpop.permute.xlu0 %1084
  %v1087 = vmul.f32 %v1075, %v1085
  %1089 = vrot.lane.b32.xlu0 %v987, 32
  %v1090 = vpop.permute.xlu0 %1089
  %1093 = vrot.lane.b32.xlu0 %v1087, 96
  %v1094 = vpop.permute.xlu0 %1093
  %v1096 = vsel %vm214, %v1090, %v1094
  %v1097 = vld [vmem:[%s8] sm:$0xff]
  %v1098 = vld [vmem:[%s8 + $0x8] sm:$0xff]
  %v1099 = vld [vmem:[%s8 + $0x10] sm:$0xff]
  %v1100 = vld [vmem:[%s8 + $0x18] sm:$0xff]
  %v1101 = vld [vmem:[%s8 + $0x20] sm:$0xff]
  %v1102 = vld [vmem:[%s8 + $0x28] sm:$0xff]
  %v1103 = vld [vmem:[%s8 + $0x30] sm:$0xff]
  %v1104 = vld [vmem:[%s8 + $0x38] sm:$0xff]
  %v1105 = vld [vmem:[%s9] sm:$0x1]
  %v1107 = vlaneseq
  %v1108 = vshrl.u32 %v1107, 7
  %v1109 = vsub.s32 0, %v1108
  %v1110 = vrot.slane %v1105, %v1109
  %vm1112 = vcmask 523264
  %v1114 = vsel %vm1112, %v1096, 0
  %1116 = vmatprep.subr.mxu0 0.0
  %1117 = vmatpush1.msra.mxu0 0.0
  %1118 = vmatprep.subr.mxu0 0.0
  %1119 = vmatpush1.msra.mxu0 0.0
  %1120 = vmatprep.subr.mxu0 0.0
  %1121 = vmatpush1.msra.mxu0 0.0
  %1122 = vmatprep.subr.mxu0 0.0
  %1123 = vmatpush1.msra.mxu0 0.0
  %1124 = vmatprep.subr.mxu0 0.0
  %1125 = vmatpush1.msra.mxu0 0.0
  %1126 = vmatprep.subr.mxu0 0.0
  %1127 = vmatpush1.msra.mxu0 0.0
  %1128 = vmatprep.subr.mxu0 0.0
  %1129 = vmatpush1.msra.mxu0 0.0
  %1130 = vmatprep.subr.mxu0 0.0
  %1131 = vmatpush1.msra.mxu0 0.0
  %1132 = vmatprep.subr.mxu0 0.0
  %1133 = vmatpush1.msra.mxu0 %v1104
  %1134 = vmatprep.subr.mxu0 0.0
  %1135 = vmatpush1.msra.mxu0 %v1103
  %1136 = vmatprep.subr.mxu0 0.0
  %1137 = vmatpush1.msra.mxu0 %v1102
  %1138 = vmatprep.subr.mxu0 0.0
  %1139 = vmatpush1.msra.mxu0 %v1101
  %1140 = vmatprep.subr.mxu0 0.0
  %1141 = vmatpush1.msra.mxu0 %v1100
  %1142 = vmatprep.subr.mxu0 0.0
  %1143 = vmatpush1.msra.mxu0 %v1099
  %1144 = vmatprep.subr.mxu0 0.0
  %1145 = vmatpush1.msra.mxu0 %v1098
  %1146 = vmatprep.subr.mxu0 0.0
  %1147 = vmatpush1.msra.mxu0 %v1097
  %1148 = vmatprep.subr.mxu0 0.0
  %1149 = vmatpush2.msra.mxu0 0.0
  %1150 = vmatprep.subr.mxu0 0.0
  %1151 = vmatpush2.msra.mxu0 0.0
  %1152 = vmatprep.subr.mxu0 0.0
  %1153 = vmatpush2.msra.mxu0 0.0
  %1154 = vmatprep.subr.mxu0 0.0
  %1155 = vmatpush2.msra.mxu0 0.0
  %1156 = vmatprep.subr.mxu0 0.0
  %1157 = vmatpush2.msra.mxu0 0.0
  %1158 = vmatprep.subr.mxu0 0.0
  %1159 = vmatpush2.msra.mxu0 0.0
  %1160 = vmatprep.subr.mxu0 0.0
  %1161 = vmatpush2.msra.mxu0 0.0
  %1162 = vmatprep.subr.mxu0 0.0
  %1163 = vmatpush2.msra.mxu0 0.0
  %1164 = vmatprep.subr.mxu0 0.0
  %1165 = vmatpush2.msra.mxu0 0.0
  %1166 = vmatprep.subr.mxu0 0.0
  %1167 = vmatpush2.msra.mxu0 0.0
  %1168 = vmatprep.subr.mxu0 0.0
  %1169 = vmatpush2.msra.mxu0 0.0
  %1170 = vmatprep.subr.mxu0 0.0
  %1171 = vmatpush2.msra.mxu0 0.0
  %1172 = vmatprep.subr.mxu0 0.0
  %1173 = vmatpush2.msra.mxu0 0.0
  %1174 = vmatprep.subr.mxu0 0.0
  %1175 = vmatpush2.msra.mxu0 0.0
  %1176 = vmatprep.subr.mxu0 0.0
  %1177 = vmatpush2.msra.mxu0 0.0
  %1178 = vmatprep.subr.mxu0 0.0
  %1179 = vmatpush2.msra.mxu0 0.0
  %1180 = vmatprep.mubr.f32.mxu0 0.0
  %1181 = vmatmul.mubr.f32.gmra.mxu0 %v1114
  %v1182 = vpop.f32.mrf.mxu0
  %v1183 = vadd.f32 %v1110, %v1182
  %v1184 = vpop.f32.mrf.mxu0
  %1185 = vdwg.mxu0
  %v1186 = vsel %vm1112, %v1183, 0.0
  %1187 = vadd.xlane.f32.xlu0 %v1186
  %v1188 = vpop.xlane.xlu0 %1187
  %v1189 = vrcp.pop 64.0
  %v1190 = vmul.f32 %v1188, %v1189
  %v1191 = vsub.f32 %v1183, %v1190
  %v1192 = vmul.f32 %v1191, %v1191
  %v1193 = vsel %vm1112, %v1192, 0.0
  %1194 = vadd.xlane.f32.xlu0 %v1193
  %v1195 = vpop.xlane.xlu0 %1194
  %v1196 = vmul.f32 %v1195, %v1189
  %v1197 = vadd.f32 %v1196, 1e-05
  %v1198 = vrsqrt.pop %v1197
  %v1199 = vmul.f32 %v1191, %v1198
  %v1200 = vld [vmem:[%s10] sm:$0x1]
  %v1202 = vlaneseq
  %v1203 = vshrl.u32 %v1202, 7
  %v1204 = vsub.s32 0, %v1203
  %v1205 = vrot.slane %v1200, %v1204
  %v1207 = vmul.f32 %v1199, %v1205
  %v1208 = vld [vmem:[%s11] sm:$0x1]
  %v1210 = vlaneseq
  %v1211 = vshrl.u32 %v1210, 7
  %v1212 = vsub.s32 0, %v1211
  %v1213 = vrot.slane %v1208, %v1212
  %v1215 = vadd.f32 %v1207, %v1213
  %v1216 = vmax.f32 %v1215, 0.0
  %v1217 = vadd.f32 %v1096, %v1216
  %s1218 = scalar_lea.vmem %s8, 64
  %v1219 = vld [vmem:[%s1218] sm:$0xff]
  %v1220 = vld [vmem:[%s1218 + $0x8] sm:$0xff]
  %v1221 = vld [vmem:[%s1218 + $0x10] sm:$0xff]
  %v1222 = vld [vmem:[%s1218 + $0x18] sm:$0xff]
  %v1223 = vld [vmem:[%s1218 + $0x20] sm:$0xff]
  %v1224 = vld [vmem:[%s1218 + $0x28] sm:$0xff]
  %v1225 = vld [vmem:[%s1218 + $0x30] sm:$0xff]
  %v1226 = vld [vmem:[%s1218 + $0x38] sm:$0xff]
  %s1227 = scalar_lea.vmem %s9, 1
  %v1228 = vld [vmem:[%s1227] sm:$0x1]
  %v1230 = vlaneseq
  %v1231 = vshrl.u32 %v1230, 7
  %v1232 = vsub.s32 0, %v1231
  %v1233 = vrot.slane %v1228, %v1232
  %v1236 = vsel %vm1112, %v1217, 0
  %1238 = vmatprep.subr.mxu0 0.0
  %1239 = vmatpush1.msra.mxu0 0.0
  %1240 = vmatprep.subr.mxu0 0.0
  %1241 = vmatpush1.msra.mxu0 0.0
  %1242 = vmatprep.subr.mxu0 0.0
  %1243 = vmatpush1.msra.mxu0 0.0
  %1244 = vmatprep.subr.mxu0 0.0
  %1245 = vmatpush1.msra.mxu0 0.0
  %1246 = vmatprep.subr.mxu0 0.0
  %1247 = vmatpush1.msra.mxu0 0.0
  %1248 = vmatprep.subr.mxu0 0.0
  %1249 = vmatpush1.msra.mxu0 0.0
  %1250 = vmatprep.subr.mxu0 0.0
  %1251 = vmatpush1.msra.mxu0 0.0
  %1252 = vmatprep.subr.mxu0 0.0
  %1253 = vmatpush1.msra.mxu0 0.0
  %1254 = vmatprep.subr.mxu0 0.0
  %1255 = vmatpush1.msra.mxu0 %v1226
  %1256 = vmatprep.subr.mxu0 0.0
  %1257 = vmatpush1.msra.mxu0 %v1225
  %1258 = vmatprep.subr.mxu0 0.0
  %1259 = vmatpush1.msra.mxu0 %v1224
  %1260 = vmatprep.subr.mxu0 0.0
  %1261 = vmatpush1.msra.mxu0 %v1223
  %1262 = vmatprep.subr.mxu0 0.0
  %1263 = vmatpush1.msra.mxu0 %v1222
  %1264 = vmatprep.subr.mxu0 0.0
  %1265 = vmatpush1.msra.mxu0 %v1221
  %1266 = vmatprep.subr.mxu0 0.0
  %1267 = vmatpush1.msra.mxu0 %v1220
  %1268 = vmatprep.subr.mxu0 0.0
  %1269 = vmatpush1.msra.mxu0 %v1219
  %1270 = vmatprep.subr.mxu0 0.0
  %1271 = vmatpush2.msra.mxu0 0.0
  %1272 = vmatprep.subr.mxu0 0.0
  %1273 = vmatpush2.msra.mxu0 0.0
  %1274 = vmatprep.subr.mxu0 0.0
  %1275 = vmatpush2.msra.mxu0 0.0
  %1276 = vmatprep.subr.mxu0 0.0
  %1277 = vmatpush2.msra.mxu0 0.0
  %1278 = vmatprep.subr.mxu0 0.0
  %1279 = vmatpush2.msra.mxu0 0.0
  %1280 = vmatprep.subr.mxu0 0.0
  %1281 = vmatpush2.msra.mxu0 0.0
  %1282 = vmatprep.subr.mxu0 0.0
  %1283 = vmatpush2.msra.mxu0 0.0
  %1284 = vmatprep.subr.mxu0 0.0
  %1285 = vmatpush2.msra.mxu0 0.0
  %1286 = vmatprep.subr.mxu0 0.0
  %1287 = vmatpush2.msra.mxu0 0.0
  %1288 = vmatprep.subr.mxu0 0.0
  %1289 = vmatpush2.msra.mxu0 0.0
  %1290 = vmatprep.subr.mxu0 0.0
  %1291 = vmatpush2.msra.mxu0 0.0
  %1292 = vmatprep.subr.mxu0 0.0
  %1293 = vmatpush2.msra.mxu0 0.0
  %1294 = vmatprep.subr.mxu0 0.0
  %1295 = vmatpush2.msra.mxu0 0.0
  %1296 = vmatprep.subr.mxu0 0.0
  %1297 = vmatpush2.msra.mxu0 0.0
  %1298 = vmatprep.subr.mxu0 0.0
  %1299 = vmatpush2.msra.mxu0 0.0
  %1300 = vmatprep.subr.mxu0 0.0
  %1301 = vmatpush2.msra.mxu0 0.0
  %1302 = vmatprep.mubr.f32.mxu0 0.0
  %1303 = vmatmul.mubr.f32.gmra.mxu0 %v1236
  %v1304 = vpop.f32.mrf.mxu0
  %v1305 = vadd.f32 %v1233, %v1304
  %v1306 = vpop.f32.mrf.mxu0
  %1307 = vdwg.mxu0
  %v1308 = vsel %vm1112, %v1305, 0.0
  %1309 = vadd.xlane.f32.xlu0 %v1308
  %v1310 = vpop.xlane.xlu0 %1309
  %v1311 = vmul.f32 %v1310, %v1189
  %v1312 = vsub.f32 %v1305, %v1311
  %v1313 = vmul.f32 %v1312, %v1312
  %v1314 = vsel %vm1112, %v1313, 0.0
  %1315 = vadd.xlane.f32.xlu0 %v1314
  %v1316 = vpop.xlane.xlu0 %1315
  %v1317 = vmul.f32 %v1316, %v1189
  %v1318 = vadd.f32 %v1317, 1e-05
  %v1319 = vrsqrt.pop %v1318
  %v1320 = vmul.f32 %v1312, %v1319
  %s1321 = scalar_lea.vmem %s10, 1
  %v1322 = vld [vmem:[%s1321] sm:$0x1]
  %v1324 = vlaneseq
  %v1325 = vshrl.u32 %v1324, 7
  %v1326 = vsub.s32 0, %v1325
  %v1327 = vrot.slane %v1322, %v1326
  %v1329 = vmul.f32 %v1320, %v1327
  %s1330 = scalar_lea.vmem %s11, 1
  %v1331 = vld [vmem:[%s1330] sm:$0x1]
  %v1333 = vlaneseq
  %v1334 = vshrl.u32 %v1333, 7
  %v1335 = vsub.s32 0, %v1334
  %v1336 = vrot.slane %v1331, %v1335
  %v1338 = vadd.f32 %v1329, %v1336
  %v1339 = vmax.f32 %v1338, 0.0
  %v1340 = vadd.f32 %v1217, %v1339
  %v1341 = vsel %vm1112, %v1340, 0.0
  %1342 = vst [vmem:[%s12] sm:$0xff] %v1341
  // Predicated region
  $region50: #{market_encoder_forward.1} parent=0 // pred_check
    _
  $region51: #{market_encoder_forward.1} parent=0 // pred_check_branch
    %1344 = sbr.rel (0) target = $region53
  $region52: #{market_encoder_forward.1} parent=0 // pred_region
    _
  $region53: #{market_encoder_forward.1} parent=0 // pred_fallthru
    _
  // Predicated region
  $region54: #{market_encoder_forward.1} parent=0 // pred_check
    _
  $region55: #{market_encoder_forward.1} parent=0 // pred_check_branch
    %1346 = sbr.rel (0) target = $region57
  $region56: #{market_encoder_forward.1} parent=0 // pred_region
    _
  $region57: #{market_encoder_forward.1} parent=0 // pred_fallthru
    _

</llo_original>
